<compile_context>
chip_gen: v6e
topology: v6e:2x2x1
jax: 0.10.0
libtpu: 0.0.40
codegen_flags: <defaults>
</compile_context>

<pallas_src>
import functools

import jax
import jax.numpy as jnp
from jax.experimental import pallas as pl
from jax.experimental.pallas import tpu as pltpu


_LN_EPS = 1e-5
_COMPUTE_DTYPE = jnp.bfloat16      # MXU operand dtype; statistics stay f32
_VMEM_LIMIT = 32 * 1024 * 1024


# ---------------------------------------------------------------------------
# Fused multi-head attention + residual add + LayerNorm kernel.
# One batch element per grid step. Q/K/V/O projections, scaled-dot-product
# attention with additive mask bias, softmax, output projection, residual add
# and LayerNorm are all computed inside the kernel.
# The attention-probability output is optional (only emitted when requested).
# ---------------------------------------------------------------------------
def _attn_addln_kernel(q_ref, kv_ref, bias_ref,
                       wq_ref, bq_ref, wk_ref, bk_ref, wv_ref, bv_ref,
                       wo_ref, bo_ref, g_ref, beta_ref,
                       *out_refs, heads_num, head_dim, scale_inv, eps):
    out_ref = out_refs[0]
    attn_ref = out_refs[1] if len(out_refs) > 1 else None

    x = q_ref[0]                     # (Lq, H) f32  -- query input, also the residual
    kv = kv_ref[0]                   # (Lk, H) f32
    bias = bias_ref[0, 0]            # (Lm, Lk) f32 additive mask bias (0 / -1e10)

    xb = x.astype(_COMPUTE_DTYPE)
    kvb = kv.astype(_COMPUTE_DTYPE)

    # Projections (bf16 operands, f32 accumulation).
    Q = jnp.dot(xb, wq_ref[...], preferred_element_type=jnp.float32) + bq_ref[0]
    K = jnp.dot(kvb, wk_ref[...], preferred_element_type=jnp.float32) + bk_ref[0]
    V = jnp.dot(kvb, wv_ref[...], preferred_element_type=jnp.float32) + bv_ref[0]

    Lq = x.shape[0]
    H = heads_num * head_dim

    # Output-projection accumulator; per-head contributions are folded in directly,
    # so no head transpose / concat relayout is needed.
    acc = jnp.zeros((Lq, H), jnp.float32)

    for h in range(heads_num):       # static unroll over heads
        sl = slice(h * head_dim, (h + 1) * head_dim)
        qh = Q[:, sl].astype(_COMPUTE_DTYPE)       # (Lq, d)
        kh = K[:, sl].astype(_COMPUTE_DTYPE)       # (Lk, d)
        vh = V[:, sl].astype(_COMPUTE_DTYPE)       # (Lk, d)

        energy = jnp.dot(qh, kh.T, preferred_element_type=jnp.float32)
        energy = energy * scale_inv + bias          # (Lq, Lk), f32

        e_max = jnp.max(energy, axis=-1, keepdims=True)
        e_exp = jnp.exp(energy - e_max)
        denom = jnp.sum(e_exp, axis=-1, keepdims=True)
        attn = e_exp * pl.reciprocal(denom, approx=True)   # softmax over keys

        if attn_ref is not None:
            attn_ref[0, h] = attn.astype(attn_ref.dtype)

        ctx_h = jnp.dot(attn.astype(_COMPUTE_DTYPE), vh,
                        preferred_element_type=jnp.float32)        # (Lq, d)
        # concat_h(ctx_h) @ Wo  ==  sum_h ctx_h @ Wo[h*d:(h+1)*d, :]
        acc = acc + jnp.dot(ctx_h.astype(_COMPUTE_DTYPE), wo_ref[sl, :],
                            preferred_element_type=jnp.float32)

    attn_out = acc + bo_ref[0]

    # Fused residual add + LayerNorm (biased variance, eps=1e-5), all in f32.
    z = x + attn_out
    mean = jnp.mean(z, axis=-1, keepdims=True)
    var = jnp.mean((z - mean) ** 2, axis=-1, keepdims=True)
    normed = (z - mean) * jax.lax.rsqrt(var + eps)
    out_ref[0] = (normed * g_ref[0] + beta_ref[0]).astype(out_ref.dtype)


def multi_head_attention_addln(query, key_value, bias, attn_params, ln_params,
                               heads_num, return_attention):
    B, Lq, H = query.shape
    Lk = key_value.shape[1]
    Lm = bias.shape[2]
    head_dim = H // heads_num
    scale_inv = 1.0 / (float(head_dim) ** 0.5)
    wq, bq, wk, bk, wv, bv, wo, bo = attn_params
    gamma, beta = ln_params

    kernel = functools.partial(_attn_addln_kernel, heads_num=heads_num,
                               head_dim=head_dim, scale_inv=scale_inv, eps=_LN_EPS)

    w_spec = pl.BlockSpec((H, H), lambda b: (0, 0))
    b_spec = pl.BlockSpec((1, H), lambda b: (0, 0))

    in_specs = [
        pl.BlockSpec((1, Lq, H), lambda b: (b, 0, 0)),
        pl.BlockSpec((1, Lk, H), lambda b: (b, 0, 0)),
        pl.BlockSpec((1, 1, Lm, Lk), lambda b: (b, 0, 0, 0)),
        w_spec, b_spec, w_spec, b_spec, w_spec, b_spec, w_spec, b_spec,
        b_spec, b_spec,                                   # LayerNorm gamma / beta
    ]

    if return_attention:
        out_shape = (jax.ShapeDtypeStruct((B, Lq, H), jnp.float32),
                     jax.ShapeDtypeStruct((B, heads_num, Lq, Lk), jnp.float32))
        out_specs = (pl.BlockSpec((1, Lq, H), lambda b: (b, 0, 0)),
                     pl.BlockSpec((1, heads_num, Lq, Lk), lambda b: (b, 0, 0, 0)))
    else:
        out_shape = jax.ShapeDtypeStruct((B, Lq, H), jnp.float32)
        out_specs = pl.BlockSpec((1, Lq, H), lambda b: (b, 0, 0))

    result = pl.pallas_call(
        kernel,
        grid=(B,),
        in_specs=in_specs,
        out_specs=out_specs,
        out_shape=out_shape,
        compiler_params=pltpu.CompilerParams(
            dimension_semantics=("parallel",),
            vmem_limit_bytes=_VMEM_LIMIT),
    )(query, key_value, bias, wq, bq, wk, bk, wv, bv, wo, bo, gamma, beta)

    if return_attention:
        out, attn = result
        return out, attn
    return result


# ---------------------------------------------------------------------------
# Fused position-wise feed-forward + residual add + LayerNorm kernel:
#   out = LN(x + relu(x @ W1 + b1) @ W2 + b2)
# ---------------------------------------------------------------------------
def _ffn_addln_kernel(x_ref, w1_ref, b1_ref, w2_ref, b2_ref, g_ref, beta_ref,
                      out_ref, *, eps):
    x = x_ref[0]                                                   # (L, H) f32 residual
    h = jnp.dot(x.astype(_COMPUTE_DTYPE), w1_ref[...],
                preferred_element_type=jnp.float32) + b1_ref[0]
    h = jnp.maximum(h, 0.0)                                        # relu
    y = jnp.dot(h.astype(_COMPUTE_DTYPE), w2_ref[...],
                preferred_element_type=jnp.float32) + b2_ref[0]

    z = x + y
    mean = jnp.mean(z, axis=-1, keepdims=True)
    var = jnp.mean((z - mean) ** 2, axis=-1, keepdims=True)
    normed = (z - mean) * jax.lax.rsqrt(var + eps)
    out_ref[0] = (normed * g_ref[0] + beta_ref[0]).astype(out_ref.dtype)


def feed_forward_addln(x, ffn_params, ln_params):
    B, L, H = x.shape
    w1, b1, w2, b2 = ffn_params
    gamma, beta = ln_params
    F = w1.shape[1]

    kernel = functools.partial(_ffn_addln_kernel, eps=_LN_EPS)
    return pl.pallas_call(
        kernel,
        grid=(B,),
        in_specs=[
            pl.BlockSpec((1, L, H), lambda b: (b, 0, 0)),
            pl.BlockSpec((H, F), lambda b: (0, 0)),
            pl.BlockSpec((1, F), lambda b: (0, 0)),
            pl.BlockSpec((F, H), lambda b: (0, 0)),
            pl.BlockSpec((1, H), lambda b: (0, 0)),
            pl.BlockSpec((1, H), lambda b: (0, 0)),
            pl.BlockSpec((1, H), lambda b: (0, 0)),
        ],
        out_specs=pl.BlockSpec((1, L, H), lambda b: (b, 0, 0)),
        out_shape=jax.ShapeDtypeStruct((B, L, H), jnp.float32),
        compiler_params=pltpu.CompilerParams(
            dimension_semantics=("parallel",),
            vmem_limit_bytes=_VMEM_LIMIT),
    )(x, w1, b1, w2, b2, gamma, beta)


# ---------------------------------------------------------------------------
# DecoderLayer forward: 3 fused Pallas kernels.
# ---------------------------------------------------------------------------
def decoder_layer_forward(params, trg, enc_src, trg_mask, src_mask, heads_num):
    # Precompute additive mask biases once in the wrapper (0 where kept, -1e10 where
    # masked) so the kernels do a single add instead of compare+select per score.
    neg = jnp.float32(-1e10)
    zero = jnp.float32(0.0)
    trg_bias = jnp.where(trg_mask == 0, neg, zero).astype(jnp.float32)
    src_bias = jnp.where(src_mask == 0, neg, zero).astype(jnp.float32)

    # self-attention + add & LayerNorm (fused; attention probs NOT materialized)
    trg = multi_head_attention_addln(trg, trg, trg_bias, params['self_attn'],
                                     params['attn_ln'], heads_num,
                                     return_attention=False)
    # encoder(cross)-attention + add & LayerNorm (fused; attention probs returned)
    trg, attention = multi_head_attention_addln(trg, enc_src, src_bias,
                                                params['cross_attn'],
                                                params['enc_attn_ln'], heads_num,
                                                return_attention=True)
    # position-wise feed-forward + add & LayerNorm (fused)
    trg = feed_forward_addln(trg, params['ffn'], params['ff_ln'])
    return trg, attention


# ---------------------------------------------------------------------------
# Deterministic parameter init (synthetic weights; Linear weights as (in, out)).
# Matmul weights are stored in bf16 (MXU operand dtype); biases and LayerNorm
# parameters stay f32.
# ---------------------------------------------------------------------------
def init_params(key, hidden_dim, feed_forward_dim):
    def linear(k, din, dout):
        kw, kb = jax.random.split(k)
        w = (jax.random.normal(kw, (din, dout), jnp.float32) * 0.02).astype(_COMPUTE_DTYPE)
        b = jax.random.normal(kb, (1, dout), jnp.float32) * 0.02
        return w, b

    keys = jax.random.split(key, 10)

    def attn_params(ks):
        wq, bq = linear(ks[0], hidden_dim, hidden_dim)
        wk, bk = linear(ks[1], hidden_dim, hidden_dim)
        wv, bv = linear(ks[2], hidden_dim, hidden_dim)
        wo, bo = linear(ks[3], hidden_dim, hidden_dim)
        return (wq, bq, wk, bk, wv, bv, wo, bo)

    ln = lambda: (jnp.ones((1, hidden_dim), jnp.float32),
                  jnp.zeros((1, hidden_dim), jnp.float32))

    w1, b1 = linear(keys[8], hidden_dim, feed_forward_dim)
    w2, b2 = linear(keys[9], feed_forward_dim, hidden_dim)

    return {
        'self_attn': attn_params(keys[0:4]),
        'attn_ln': ln(),
        'cross_attn': attn_params(keys[4:8]),
        'enc_attn_ln': ln(),
        'ffn': (w1, b1, w2, b2),
        'ff_ln': ln(),
    }


if __name__ == "__main__":
    batch = 2
    trg_len = 8
    src_len = 8
    hidden_dim = 32
    feed_forward_dim = 64
    heads_num = 4

    key = jax.random.PRNGKey(0)
    k_trg, k_src, k_params = jax.random.split(key, 3)

    trg = jax.random.normal(k_trg, (batch, trg_len, hidden_dim), jnp.float32)
    enc_src = jax.random.normal(k_src, (batch, src_len, hidden_dim), jnp.float32)

    # causal target mask [B, 1, trg_len, trg_len]; padding-style source mask [B, 1, 1, src_len]
    trg_mask = jnp.tril(jnp.ones((trg_len, trg_len), jnp.float32))
    trg_mask = jnp.broadcast_to(trg_mask, (batch, 1, trg_len, trg_len))
    src_mask = jnp.ones((batch, 1, 1, src_len), jnp.float32)
    src_mask = src_mask.at[:, :, :, -2:].set(0.0)   # mask last two source positions

    params = init_params(k_params, hidden_dim, feed_forward_dim)

    out, attention = decoder_layer_forward(params, trg, enc_src,
                                           trg_mask, src_mask, heads_num)
    jax.block_until_ready((out, attention))

    assert out.shape == (batch, trg_len, hidden_dim)
    assert attention.shape == (batch, heads_num, trg_len, src_len)
    print("KERNEL_OK")
</pallas_src>

<mosaic_0001>
module attributes {stable_mosaic.version = 11 : i64} {
  func.func @_attn_addln_kernel(%arg0: i32, %arg1: memref<1x8x32xf32, #tpu.memory_space<vmem>>, %arg2: memref<1x8x32xf32, #tpu.memory_space<vmem>>, %arg3: memref<1x1x8x8xf32, #tpu.memory_space<vmem>>, %arg4: memref<32x32xbf16, #tpu.memory_space<vmem>>, %arg5: memref<1x32xf32, #tpu.memory_space<vmem>>, %arg6: memref<32x32xbf16, #tpu.memory_space<vmem>>, %arg7: memref<1x32xf32, #tpu.memory_space<vmem>>, %arg8: memref<32x32xbf16, #tpu.memory_space<vmem>>, %arg9: memref<1x32xf32, #tpu.memory_space<vmem>>, %arg10: memref<32x32xbf16, #tpu.memory_space<vmem>>, %arg11: memref<1x32xf32, #tpu.memory_space<vmem>>, %arg12: memref<1x32xf32, #tpu.memory_space<vmem>>, %arg13: memref<1x32xf32, #tpu.memory_space<vmem>>, %arg14: memref<1x8x32xf32, #tpu.memory_space<vmem>>) attributes {dimension_semantics = [#tpu.dimension_semantics<parallel>], iteration_bounds = array<i64: 2>, scalar_prefetch = 0 : i64, scratch_operands = 0 : i64, tpu.core_type = #tpu.core_type<tc>, window_params = [{transform_indices = @transform_0, window_bounds = array<i64: 1, 8, 32>}, {transform_indices = @transform_1, window_bounds = array<i64: 1, 8, 32>}, {transform_indices = @transform_2, window_bounds = array<i64: 1, 1, 8, 8>}, {pipeline_mode = #tpu.pipeline_mode<synchronous>, transform_indices = @transform_3, window_bounds = array<i64: 32, 32>}, {pipeline_mode = #tpu.pipeline_mode<synchronous>, transform_indices = @transform_4, window_bounds = array<i64: 1, 32>}, {pipeline_mode = #tpu.pipeline_mode<synchronous>, transform_indices = @transform_5, window_bounds = array<i64: 32, 32>}, {pipeline_mode = #tpu.pipeline_mode<synchronous>, transform_indices = @transform_6, window_bounds = array<i64: 1, 32>}, {pipeline_mode = #tpu.pipeline_mode<synchronous>, transform_indices = @transform_7, window_bounds = array<i64: 32, 32>}, {pipeline_mode = #tpu.pipeline_mode<synchronous>, transform_indices = @transform_8, window_bounds = array<i64: 1, 32>}, {pipeline_mode = #tpu.pipeline_mode<synchronous>, transform_indices = @transform_9, window_bounds = array<i64: 32, 32>}, {pipeline_mode = #tpu.pipeline_mode<synchronous>, transform_indices = @transform_10, window_bounds = array<i64: 1, 32>}, {pipeline_mode = #tpu.pipeline_mode<synchronous>, transform_indices = @transform_11, window_bounds = array<i64: 1, 32>}, {pipeline_mode = #tpu.pipeline_mode<synchronous>, transform_indices = @transform_12, window_bounds = array<i64: 1, 32>}, {transform_indices = @transform_13, window_bounds = array<i64: 1, 8, 32>}]} {
    %c0 = arith.constant 0 : index
    %c0_0 = arith.constant 0 : index
    %c0_1 = arith.constant 0 : index
    %0 = vector.load %arg1[%c0, %c0_0, %c0_1] : memref<1x8x32xf32, #tpu.memory_space<vmem>>, vector<1x8x32xf32>
    %1 = vector.shape_cast %0 : vector<1x8x32xf32> to vector<8x32xf32>
    %c0_2 = arith.constant 0 : index
    %c0_3 = arith.constant 0 : index
    %c0_4 = arith.constant 0 : index
    %2 = vector.load %arg2[%c0_2, %c0_3, %c0_4] : memref<1x8x32xf32, #tpu.memory_space<vmem>>, vector<1x8x32xf32>
    %3 = vector.shape_cast %2 : vector<1x8x32xf32> to vector<8x32xf32>
    %c0_5 = arith.constant 0 : index
    %c0_6 = arith.constant 0 : index
    %c0_7 = arith.constant 0 : index
    %c0_8 = arith.constant 0 : index
    %4 = vector.load %arg3[%c0_5, %c0_6, %c0_7, %c0_8] : memref<1x1x8x8xf32, #tpu.memory_space<vmem>>, vector<1x1x8x8xf32>
    %5 = vector.shape_cast %4 : vector<1x1x8x8xf32> to vector<8x8xf32>
    %6 = arith.truncf %1 : vector<8x32xf32> to vector<8x32xbf16>
    %7 = arith.truncf %3 : vector<8x32xf32> to vector<8x32xbf16>
    %c0_9 = arith.constant 0 : index
    %c0_10 = arith.constant 0 : index
    %8 = vector.load %arg4[%c0_9, %c0_10] : memref<32x32xbf16, #tpu.memory_space<vmem>>, vector<32x32xbf16>
    %cst = arith.constant dense<0.000000e+00> : vector<8x32xf32>
    %9 = tpu.matmul %6, %8, %cst {dimension_numbers = #tpu.dot_dimension_numbers<[1], [0], [0], [1], [0, 0, 1, 1], [], []>} : vector<8x32xbf16>, vector<32x32xbf16>, vector<8x32xf32> -> vector<8x32xf32>
    %c0_11 = arith.constant 0 : index
    %c0_12 = arith.constant 0 : index
    %10 = vector.load %arg5[%c0_11, %c0_12] : memref<1x32xf32, #tpu.memory_space<vmem>>, vector<1x32xf32>
    %11 = vector.shape_cast %10 : vector<1x32xf32> to vector<32xf32>
    %12 = vector.shape_cast %11 : vector<32xf32> to vector<1x32xf32>
    %13 = vector.broadcast %12 : vector<1x32xf32> to vector<8x32xf32>
    %14 = arith.addf %9, %13 : vector<8x32xf32>
    %c0_13 = arith.constant 0 : index
    %c0_14 = arith.constant 0 : index
    %15 = vector.load %arg6[%c0_13, %c0_14] : memref<32x32xbf16, #tpu.memory_space<vmem>>, vector<32x32xbf16>
    %cst_15 = arith.constant dense<0.000000e+00> : vector<8x32xf32>
    %16 = tpu.matmul %7, %15, %cst_15 {dimension_numbers = #tpu.dot_dimension_numbers<[1], [0], [0], [1], [0, 0, 1, 1], [], []>} : vector<8x32xbf16>, vector<32x32xbf16>, vector<8x32xf32> -> vector<8x32xf32>
    %c0_16 = arith.constant 0 : index
    %c0_17 = arith.constant 0 : index
    %17 = vector.load %arg7[%c0_16, %c0_17] : memref<1x32xf32, #tpu.memory_space<vmem>>, vector<1x32xf32>
    %18 = vector.shape_cast %17 : vector<1x32xf32> to vector<32xf32>
    %19 = vector.shape_cast %18 : vector<32xf32> to vector<1x32xf32>
    %20 = vector.broadcast %19 : vector<1x32xf32> to vector<8x32xf32>
    %21 = arith.addf %16, %20 : vector<8x32xf32>
    %c0_18 = arith.constant 0 : index
    %c0_19 = arith.constant 0 : index
    %22 = vector.load %arg8[%c0_18, %c0_19] : memref<32x32xbf16, #tpu.memory_space<vmem>>, vector<32x32xbf16>
    %cst_20 = arith.constant dense<0.000000e+00> : vector<8x32xf32>
    %23 = tpu.matmul %7, %22, %cst_20 {dimension_numbers = #tpu.dot_dimension_numbers<[1], [0], [0], [1], [0, 0, 1, 1], [], []>} : vector<8x32xbf16>, vector<32x32xbf16>, vector<8x32xf32> -> vector<8x32xf32>
    %c0_21 = arith.constant 0 : index
    %c0_22 = arith.constant 0 : index
    %24 = vector.load %arg9[%c0_21, %c0_22] : memref<1x32xf32, #tpu.memory_space<vmem>>, vector<1x32xf32>
    %25 = vector.shape_cast %24 : vector<1x32xf32> to vector<32xf32>
    %26 = vector.shape_cast %25 : vector<32xf32> to vector<1x32xf32>
    %27 = vector.broadcast %26 : vector<1x32xf32> to vector<8x32xf32>
    %28 = arith.addf %23, %27 : vector<8x32xf32>
    %cst_23 = arith.constant 0.000000e+00 : f32
    %29 = vector.broadcast %cst_23 : f32 to vector<8x32xf32>
    %30 = vector.extract_strided_slice %14 {offsets = [0, 0], sizes = [8, 8], strides = [1, 1]} : vector<8x32xf32> to vector<8x8xf32>
    %31 = arith.truncf %30 : vector<8x8xf32> to vector<8x8xbf16>
    %32 = vector.extract_strided_slice %21 {offsets = [0, 0], sizes = [8, 8], strides = [1, 1]} : vector<8x32xf32> to vector<8x8xf32>
    %33 = arith.truncf %32 : vector<8x8xf32> to vector<8x8xbf16>
    %34 = vector.extract_strided_slice %28 {offsets = [0, 0], sizes = [8, 8], strides = [1, 1]} : vector<8x32xf32> to vector<8x8xf32>
    %35 = arith.truncf %34 : vector<8x8xf32> to vector<8x8xbf16>
    %36 = tpu.transpose %33, [1, 0] : vector<8x8xbf16> -> vector<8x8xbf16>
    %cst_24 = arith.constant dense<0.000000e+00> : vector<8x8xf32>
    %37 = tpu.matmul %31, %36, %cst_24 {dimension_numbers = #tpu.dot_dimension_numbers<[1], [0], [0], [1], [0, 0, 1, 1], [], []>} : vector<8x8xbf16>, vector<8x8xbf16>, vector<8x8xf32> -> vector<8x8xf32>
    %cst_25 = arith.constant 0.353553385 : f32
    %38 = vector.broadcast %cst_25 : f32 to vector<8x8xf32>
    %39 = arith.mulf %37, %38 : vector<8x8xf32>
    %40 = arith.addf %39, %5 : vector<8x8xf32>
    %cst_26 = arith.constant dense<0xFF800000> : vector<8xf32>
    %41 = vector.multi_reduction <maximumf>, %40, %cst_26 [1] : vector<8x8xf32> to vector<8xf32>
    %42 = vector.shape_cast %41 : vector<8xf32> to vector<8x1xf32>
    %43 = vector.broadcast %42 : vector<8x1xf32> to vector<8x8xf32>
    %44 = arith.subf %40, %43 : vector<8x8xf32>
    %45 = math.exp %44 : vector<8x8xf32>
    %cst_27 = arith.constant dense<0.000000e+00> : vector<8xf32>
    %46 = vector.multi_reduction <add>, %45, %cst_27 [1] : vector<8x8xf32> to vector<8xf32>
    %47 = vector.shape_cast %46 : vector<8xf32> to vector<8x1xf32>
    %48 = tpu.reciprocal %47 {approx = true} : vector<8x1xf32> -> vector<8x1xf32>
    %49 = vector.broadcast %48 : vector<8x1xf32> to vector<8x8xf32>
    %50 = arith.mulf %45, %49 : vector<8x8xf32>
    %51 = arith.truncf %50 : vector<8x8xf32> to vector<8x8xbf16>
    %cst_28 = arith.constant dense<0.000000e+00> : vector<8x8xf32>
    %52 = tpu.matmul %51, %35, %cst_28 {dimension_numbers = #tpu.dot_dimension_numbers<[1], [0], [0], [1], [0, 0, 1, 1], [], []>} : vector<8x8xbf16>, vector<8x8xbf16>, vector<8x8xf32> -> vector<8x8xf32>
    %53 = arith.truncf %52 : vector<8x8xf32> to vector<8x8xbf16>
    %c0_29 = arith.constant 0 : index
    %c0_30 = arith.constant 0 : index
    %54 = vector.load %arg10[%c0_29, %c0_30] : memref<32x32xbf16, #tpu.memory_space<vmem>>, vector<8x32xbf16>
    %cst_31 = arith.constant dense<0.000000e+00> : vector<8x32xf32>
    %55 = tpu.matmul %53, %54, %cst_31 {dimension_numbers = #tpu.dot_dimension_numbers<[1], [0], [0], [1], [0, 0, 1, 1], [], []>} : vector<8x8xbf16>, vector<8x32xbf16>, vector<8x32xf32> -> vector<8x32xf32>
    %56 = arith.addf %29, %55 : vector<8x32xf32>
    %57 = vector.extract_strided_slice %14 {offsets = [0, 8], sizes = [8, 8], strides = [1, 1]} : vector<8x32xf32> to vector<8x8xf32>
    %58 = arith.truncf %57 : vector<8x8xf32> to vector<8x8xbf16>
    %59 = vector.extract_strided_slice %21 {offsets = [0, 8], sizes = [8, 8], strides = [1, 1]} : vector<8x32xf32> to vector<8x8xf32>
    %60 = arith.truncf %59 : vector<8x8xf32> to vector<8x8xbf16>
    %61 = vector.extract_strided_slice %28 {offsets = [0, 8], sizes = [8, 8], strides = [1, 1]} : vector<8x32xf32> to vector<8x8xf32>
    %62 = arith.truncf %61 : vector<8x8xf32> to vector<8x8xbf16>
    %63 = tpu.transpose %60, [1, 0] : vector<8x8xbf16> -> vector<8x8xbf16>
    %cst_32 = arith.constant dense<0.000000e+00> : vector<8x8xf32>
    %64 = tpu.matmul %58, %63, %cst_32 {dimension_numbers = #tpu.dot_dimension_numbers<[1], [0], [0], [1], [0, 0, 1, 1], [], []>} : vector<8x8xbf16>, vector<8x8xbf16>, vector<8x8xf32> -> vector<8x8xf32>
    %cst_33 = arith.constant 0.353553385 : f32
    %65 = vector.broadcast %cst_33 : f32 to vector<8x8xf32>
    %66 = arith.mulf %64, %65 : vector<8x8xf32>
    %67 = arith.addf %66, %5 : vector<8x8xf32>
    %cst_34 = arith.constant dense<0xFF800000> : vector<8xf32>
    %68 = vector.multi_reduction <maximumf>, %67, %cst_34 [1] : vector<8x8xf32> to vector<8xf32>
    %69 = vector.shape_cast %68 : vector<8xf32> to vector<8x1xf32>
    %70 = vector.broadcast %69 : vector<8x1xf32> to vector<8x8xf32>
    %71 = arith.subf %67, %70 : vector<8x8xf32>
    %72 = math.exp %71 : vector<8x8xf32>
    %cst_35 = arith.constant dense<0.000000e+00> : vector<8xf32>
    %73 = vector.multi_reduction <add>, %72, %cst_35 [1] : vector<8x8xf32> to vector<8xf32>
    %74 = vector.shape_cast %73 : vector<8xf32> to vector<8x1xf32>
    %75 = tpu.reciprocal %74 {approx = true} : vector<8x1xf32> -> vector<8x1xf32>
    %76 = vector.broadcast %75 : vector<8x1xf32> to vector<8x8xf32>
    %77 = arith.mulf %72, %76 : vector<8x8xf32>
    %78 = arith.truncf %77 : vector<8x8xf32> to vector<8x8xbf16>
    %cst_36 = arith.constant dense<0.000000e+00> : vector<8x8xf32>
    %79 = tpu.matmul %78, %62, %cst_36 {dimension_numbers = #tpu.dot_dimension_numbers<[1], [0], [0], [1], [0, 0, 1, 1], [], []>} : vector<8x8xbf16>, vector<8x8xbf16>, vector<8x8xf32> -> vector<8x8xf32>
    %80 = arith.truncf %79 : vector<8x8xf32> to vector<8x8xbf16>
    %c8 = arith.constant 8 : index
    %c0_37 = arith.constant 0 : index
    %81 = vector.load %arg10[%c8, %c0_37] : memref<32x32xbf16, #tpu.memory_space<vmem>>, vector<8x32xbf16>
    %cst_38 = arith.constant dense<0.000000e+00> : vector<8x32xf32>
    %82 = tpu.matmul %80, %81, %cst_38 {dimension_numbers = #tpu.dot_dimension_numbers<[1], [0], [0], [1], [0, 0, 1, 1], [], []>} : vector<8x8xbf16>, vector<8x32xbf16>, vector<8x32xf32> -> vector<8x32xf32>
    %83 = arith.addf %56, %82 : vector<8x32xf32>
    %84 = vector.extract_strided_slice %14 {offsets = [0, 16], sizes = [8, 8], strides = [1, 1]} : vector<8x32xf32> to vector<8x8xf32>
    %85 = arith.truncf %84 : vector<8x8xf32> to vector<8x8xbf16>
    %86 = vector.extract_strided_slice %21 {offsets = [0, 16], sizes = [8, 8], strides = [1, 1]} : vector<8x32xf32> to vector<8x8xf32>
    %87 = arith.truncf %86 : vector<8x8xf32> to vector<8x8xbf16>
    %88 = vector.extract_strided_slice %28 {offsets = [0, 16], sizes = [8, 8], strides = [1, 1]} : vector<8x32xf32> to vector<8x8xf32>
    %89 = arith.truncf %88 : vector<8x8xf32> to vector<8x8xbf16>
    %90 = tpu.transpose %87, [1, 0] : vector<8x8xbf16> -> vector<8x8xbf16>
    %cst_39 = arith.constant dense<0.000000e+00> : vector<8x8xf32>
    %91 = tpu.matmul %85, %90, %cst_39 {dimension_numbers = #tpu.dot_dimension_numbers<[1], [0], [0], [1], [0, 0, 1, 1], [], []>} : vector<8x8xbf16>, vector<8x8xbf16>, vector<8x8xf32> -> vector<8x8xf32>
    %cst_40 = arith.constant 0.353553385 : f32
    %92 = vector.broadcast %cst_40 : f32 to vector<8x8xf32>
    %93 = arith.mulf %91, %92 : vector<8x8xf32>
    %94 = arith.addf %93, %5 : vector<8x8xf32>
    %cst_41 = arith.constant dense<0xFF800000> : vector<8xf32>
    %95 = vector.multi_reduction <maximumf>, %94, %cst_41 [1] : vector<8x8xf32> to vector<8xf32>
    %96 = vector.shape_cast %95 : vector<8xf32> to vector<8x1xf32>
    %97 = vector.broadcast %96 : vector<8x1xf32> to vector<8x8xf32>
    %98 = arith.subf %94, %97 : vector<8x8xf32>
    %99 = math.exp %98 : vector<8x8xf32>
    %cst_42 = arith.constant dense<0.000000e+00> : vector<8xf32>
    %100 = vector.multi_reduction <add>, %99, %cst_42 [1] : vector<8x8xf32> to vector<8xf32>
    %101 = vector.shape_cast %100 : vector<8xf32> to vector<8x1xf32>
    %102 = tpu.reciprocal %101 {approx = true} : vector<8x1xf32> -> vector<8x1xf32>
    %103 = vector.broadcast %102 : vector<8x1xf32> to vector<8x8xf32>
    %104 = arith.mulf %99, %103 : vector<8x8xf32>
    %105 = arith.truncf %104 : vector<8x8xf32> to vector<8x8xbf16>
    %cst_43 = arith.constant dense<0.000000e+00> : vector<8x8xf32>
    %106 = tpu.matmul %105, %89, %cst_43 {dimension_numbers = #tpu.dot_dimension_numbers<[1], [0], [0], [1], [0, 0, 1, 1], [], []>} : vector<8x8xbf16>, vector<8x8xbf16>, vector<8x8xf32> -> vector<8x8xf32>
    %107 = arith.truncf %106 : vector<8x8xf32> to vector<8x8xbf16>
    %c16 = arith.constant 16 : index
    %c0_44 = arith.constant 0 : index
    %108 = vector.load %arg10[%c16, %c0_44] : memref<32x32xbf16, #tpu.memory_space<vmem>>, vector<8x32xbf16>
    %cst_45 = arith.constant dense<0.000000e+00> : vector<8x32xf32>
    %109 = tpu.matmul %107, %108, %cst_45 {dimension_numbers = #tpu.dot_dimension_numbers<[1], [0], [0], [1], [0, 0, 1, 1], [], []>} : vector<8x8xbf16>, vector<8x32xbf16>, vector<8x32xf32> -> vector<8x32xf32>
    %110 = arith.addf %83, %109 : vector<8x32xf32>
    %111 = vector.extract_strided_slice %14 {offsets = [0, 24], sizes = [8, 8], strides = [1, 1]} : vector<8x32xf32> to vector<8x8xf32>
    %112 = arith.truncf %111 : vector<8x8xf32> to vector<8x8xbf16>
    %113 = vector.extract_strided_slice %21 {offsets = [0, 24], sizes = [8, 8], strides = [1, 1]} : vector<8x32xf32> to vector<8x8xf32>
    %114 = arith.truncf %113 : vector<8x8xf32> to vector<8x8xbf16>
    %115 = vector.extract_strided_slice %28 {offsets = [0, 24], sizes = [8, 8], strides = [1, 1]} : vector<8x32xf32> to vector<8x8xf32>
    %116 = arith.truncf %115 : vector<8x8xf32> to vector<8x8xbf16>
    %117 = tpu.transpose %114, [1, 0] : vector<8x8xbf16> -> vector<8x8xbf16>
    %cst_46 = arith.constant dense<0.000000e+00> : vector<8x8xf32>
    %118 = tpu.matmul %112, %117, %cst_46 {dimension_numbers = #tpu.dot_dimension_numbers<[1], [0], [0], [1], [0, 0, 1, 1], [], []>} : vector<8x8xbf16>, vector<8x8xbf16>, vector<8x8xf32> -> vector<8x8xf32>
    %cst_47 = arith.constant 0.353553385 : f32
    %119 = vector.broadcast %cst_47 : f32 to vector<8x8xf32>
    %120 = arith.mulf %118, %119 : vector<8x8xf32>
    %121 = arith.addf %120, %5 : vector<8x8xf32>
    %cst_48 = arith.constant dense<0xFF800000> : vector<8xf32>
    %122 = vector.multi_reduction <maximumf>, %121, %cst_48 [1] : vector<8x8xf32> to vector<8xf32>
    %123 = vector.shape_cast %122 : vector<8xf32> to vector<8x1xf32>
    %124 = vector.broadcast %123 : vector<8x1xf32> to vector<8x8xf32>
    %125 = arith.subf %121, %124 : vector<8x8xf32>
    %126 = math.exp %125 : vector<8x8xf32>
    %cst_49 = arith.constant dense<0.000000e+00> : vector<8xf32>
    %127 = vector.multi_reduction <add>, %126, %cst_49 [1] : vector<8x8xf32> to vector<8xf32>
    %128 = vector.shape_cast %127 : vector<8xf32> to vector<8x1xf32>
    %129 = tpu.reciprocal %128 {approx = true} : vector<8x1xf32> -> vector<8x1xf32>
    %130 = vector.broadcast %129 : vector<8x1xf32> to vector<8x8xf32>
    %131 = arith.mulf %126, %130 : vector<8x8xf32>
    %132 = arith.truncf %131 : vector<8x8xf32> to vector<8x8xbf16>
    %cst_50 = arith.constant dense<0.000000e+00> : vector<8x8xf32>
    %133 = tpu.matmul %132, %116, %cst_50 {dimension_numbers = #tpu.dot_dimension_numbers<[1], [0], [0], [1], [0, 0, 1, 1], [], []>} : vector<8x8xbf16>, vector<8x8xbf16>, vector<8x8xf32> -> vector<8x8xf32>
    %134 = arith.truncf %133 : vector<8x8xf32> to vector<8x8xbf16>
    %c24 = arith.constant 24 : index
    %c0_51 = arith.constant 0 : index
    %135 = vector.load %arg10[%c24, %c0_51] : memref<32x32xbf16, #tpu.memory_space<vmem>>, vector<8x32xbf16>
    %cst_52 = arith.constant dense<0.000000e+00> : vector<8x32xf32>
    %136 = tpu.matmul %134, %135, %cst_52 {dimension_numbers = #tpu.dot_dimension_numbers<[1], [0], [0], [1], [0, 0, 1, 1], [], []>} : vector<8x8xbf16>, vector<8x32xbf16>, vector<8x32xf32> -> vector<8x32xf32>
    %137 = arith.addf %110, %136 : vector<8x32xf32>
    %c0_53 = arith.constant 0 : index
    %c0_54 = arith.constant 0 : index
    %138 = vector.load %arg11[%c0_53, %c0_54] : memref<1x32xf32, #tpu.memory_space<vmem>>, vector<1x32xf32>
    %139 = vector.shape_cast %138 : vector<1x32xf32> to vector<32xf32>
    %140 = vector.shape_cast %139 : vector<32xf32> to vector<1x32xf32>
    %141 = vector.broadcast %140 : vector<1x32xf32> to vector<8x32xf32>
    %142 = arith.addf %137, %141 : vector<8x32xf32>
    %143 = arith.addf %1, %142 : vector<8x32xf32>
    %cst_55 = arith.constant dense<0.000000e+00> : vector<8xf32>
    %144 = vector.multi_reduction <add>, %143, %cst_55 [1] : vector<8x32xf32> to vector<8xf32>
    %145 = vector.shape_cast %144 : vector<8xf32> to vector<8x1xf32>
    %cst_56 = arith.constant 3.200000e+01 : f32
    %146 = vector.broadcast %cst_56 : f32 to vector<8x1xf32>
    %147 = arith.divf %145, %146 : vector<8x1xf32>
    %148 = vector.broadcast %147 : vector<8x1xf32> to vector<8x32xf32>
    %149 = arith.subf %143, %148 : vector<8x32xf32>
    %150 = arith.mulf %149, %149 : vector<8x32xf32>
    %cst_57 = arith.constant dense<0.000000e+00> : vector<8xf32>
    %151 = vector.multi_reduction <add>, %150, %cst_57 [1] : vector<8x32xf32> to vector<8xf32>
    %152 = vector.shape_cast %151 : vector<8xf32> to vector<8x1xf32>
    %cst_58 = arith.constant 3.200000e+01 : f32
    %153 = vector.broadcast %cst_58 : f32 to vector<8x1xf32>
    %154 = arith.divf %152, %153 : vector<8x1xf32>
    %155 = vector.broadcast %147 : vector<8x1xf32> to vector<8x32xf32>
    %156 = arith.subf %143, %155 : vector<8x32xf32>
    %cst_59 = arith.constant 9.99999974E-6 : f32
    %157 = vector.broadcast %cst_59 : f32 to vector<8x1xf32>
    %158 = arith.addf %154, %157 : vector<8x1xf32>
    %159 = math.rsqrt %158 : vector<8x1xf32>
    %160 = vector.broadcast %159 : vector<8x1xf32> to vector<8x32xf32>
    %161 = arith.mulf %156, %160 : vector<8x32xf32>
    %c0_60 = arith.constant 0 : index
    %c0_61 = arith.constant 0 : index
    %162 = vector.load %arg12[%c0_60, %c0_61] : memref<1x32xf32, #tpu.memory_space<vmem>>, vector<1x32xf32>
    %163 = vector.shape_cast %162 : vector<1x32xf32> to vector<32xf32>
    %164 = vector.shape_cast %163 : vector<32xf32> to vector<1x32xf32>
    %165 = vector.broadcast %164 : vector<1x32xf32> to vector<8x32xf32>
    %166 = arith.mulf %161, %165 : vector<8x32xf32>
    %c0_62 = arith.constant 0 : index
    %c0_63 = arith.constant 0 : index
    %167 = vector.load %arg13[%c0_62, %c0_63] : memref<1x32xf32, #tpu.memory_space<vmem>>, vector<1x32xf32>
    %168 = vector.shape_cast %167 : vector<1x32xf32> to vector<32xf32>
    %169 = vector.shape_cast %168 : vector<32xf32> to vector<1x32xf32>
    %170 = vector.broadcast %169 : vector<1x32xf32> to vector<8x32xf32>
    %171 = arith.addf %166, %170 : vector<8x32xf32>
    %c0_64 = arith.constant 0 : index
    %c0_65 = arith.constant 0 : index
    %c0_66 = arith.constant 0 : index
    %172 = vector.load %arg14[%c0_64, %c0_65, %c0_66] : memref<1x8x32xf32, #tpu.memory_space<vmem>>, vector<1x8x32xf32>
    %173 = vector.shape_cast %172 : vector<1x8x32xf32> to vector<8x32xf32>
    %174 = vector.shape_cast %171 : vector<8x32xf32> to vector<1x8x32xf32>
    tpu.vector_store %arg14[%c0_64, %c0_65, %c0_66], %174 {strides = array<i32>} : memref<1x8x32xf32, #tpu.memory_space<vmem>>, vector<1x8x32xf32>,
    return
  }
  func.func @transform_0(%arg0: i32) -> (i32, i32, i32) {
    %c0_i32 = arith.constant 0 : i32
    %c0_i32_0 = arith.constant 0 : i32
    %c0_i32_1 = arith.constant 0 : i32
    return %arg0, %c0_i32, %c0_i32_0 : i32, i32, i32
  }
  func.func @transform_1(%arg0: i32) -> (i32, i32, i32) {
    %c0_i32 = arith.constant 0 : i32
    %c0_i32_0 = arith.constant 0 : i32
    %c0_i32_1 = arith.constant 0 : i32
    return %arg0, %c0_i32, %c0_i32_0 : i32, i32, i32
  }
  func.func @transform_2(%arg0: i32) -> (i32, i32, i32, i32) {
    %c0_i32 = arith.constant 0 : i32
    %c0_i32_0 = arith.constant 0 : i32
    %c0_i32_1 = arith.constant 0 : i32
    %c0_i32_2 = arith.constant 0 : i32
    return %arg0, %c0_i32, %c0_i32_0, %c0_i32_1 : i32, i32, i32, i32
  }
  func.func @transform_3(%arg0: i32) -> (i32, i32) {
    %c0_i32 = arith.constant 0 : i32
    %c0_i32_0 = arith.constant 0 : i32
    %c0_i32_1 = arith.constant 0 : i32
    return %c0_i32, %c0_i32_0 : i32, i32
  }
  func.func @transform_4(%arg0: i32) -> (i32, i32) {
    %c0_i32 = arith.constant 0 : i32
    %c0_i32_0 = arith.constant 0 : i32
    %c0_i32_1 = arith.constant 0 : i32
    return %c0_i32, %c0_i32_0 : i32, i32
  }
  func.func @transform_5(%arg0: i32) -> (i32, i32) {
    %c0_i32 = arith.constant 0 : i32
    %c0_i32_0 = arith.constant 0 : i32
    %c0_i32_1 = arith.constant 0 : i32
    return %c0_i32, %c0_i32_0 : i32, i32
  }
  func.func @transform_6(%arg0: i32) -> (i32, i32) {
    %c0_i32 = arith.constant 0 : i32
    %c0_i32_0 = arith.constant 0 : i32
    %c0_i32_1 = arith.constant 0 : i32
    return %c0_i32, %c0_i32_0 : i32, i32
  }
  func.func @transform_7(%arg0: i32) -> (i32, i32) {
    %c0_i32 = arith.constant 0 : i32
    %c0_i32_0 = arith.constant 0 : i32
    %c0_i32_1 = arith.constant 0 : i32
    return %c0_i32, %c0_i32_0 : i32, i32
  }
  func.func @transform_8(%arg0: i32) -> (i32, i32) {
    %c0_i32 = arith.constant 0 : i32
    %c0_i32_0 = arith.constant 0 : i32
    %c0_i32_1 = arith.constant 0 : i32
    return %c0_i32, %c0_i32_0 : i32, i32
  }
  func.func @transform_9(%arg0: i32) -> (i32, i32) {
    %c0_i32 = arith.constant 0 : i32
    %c0_i32_0 = arith.constant 0 : i32
    %c0_i32_1 = arith.constant 0 : i32
    return %c0_i32, %c0_i32_0 : i32, i32
  }
  func.func @transform_10(%arg0: i32) -> (i32, i32) {
    %c0_i32 = arith.constant 0 : i32
    %c0_i32_0 = arith.constant 0 : i32
    %c0_i32_1 = arith.constant 0 : i32
    return %c0_i32, %c0_i32_0 : i32, i32
  }
  func.func @transform_11(%arg0: i32) -> (i32, i32) {
    %c0_i32 = arith.constant 0 : i32
    %c0_i32_0 = arith.constant 0 : i32
    %c0_i32_1 = arith.constant 0 : i32
    return %c0_i32, %c0_i32_0 : i32, i32
  }
  func.func @transform_12(%arg0: i32) -> (i32, i32) {
    %c0_i32 = arith.constant 0 : i32
    %c0_i32_0 = arith.constant 0 : i32
    %c0_i32_1 = arith.constant 0 : i32
    return %c0_i32, %c0_i32_0 : i32, i32
  }
  func.func @transform_13(%arg0: i32) -> (i32, i32, i32) {
    %c0_i32 = arith.constant 0 : i32
    %c0_i32_0 = arith.constant 0 : i32
    %c0_i32_1 = arith.constant 0 : i32
    return %arg0, %c0_i32, %c0_i32_0 : i32, i32, i32
  }
}

</mosaic_0001>

<llo_original>
// kernel: tpu_custom_call.1
$region0: #{tpu_custom_call.1}
  #allocation0 [shape = 'u32[]', space=smem, size = 0x4, offset = 0x4, fixed_abs, tag = 'smem constant byte address 0x4 - core index']
  #allocation1 [shape = 'u32[144,128]{1,0:T(1,128)}', space=vmem, size = 0x12000, scoped, tag = 'internal scratch']
  %s0 = inlined_call_operand.hbm [shape: f32[2,8,32], index: 0, kind: input, shape index: {}]
  %s1 = inlined_call_operand.hbm [shape: f32[2,8,32], index: 1, kind: input, shape index: {}]
  %s2 = inlined_call_operand.hbm [shape: f32[2,1,8,8], index: 2, kind: input, shape index: {}]
  %s3 = inlined_call_operand.hbm [shape: bf16[32,32], index: 3, kind: input, shape index: {}]
  %s4 = inlined_call_operand.hbm [shape: f32[1,32], index: 4, kind: input, shape index: {}]
  %s5 = inlined_call_operand.hbm [shape: bf16[32,32], index: 5, kind: input, shape index: {}]
  %s6 = inlined_call_operand.hbm [shape: f32[1,32], index: 6, kind: input, shape index: {}]
  %s7 = inlined_call_operand.hbm [shape: bf16[32,32], index: 7, kind: input, shape index: {}]
  %s8 = inlined_call_operand.hbm [shape: f32[1,32], index: 8, kind: input, shape index: {}]
  %s9 = inlined_call_operand.vmem [shape: bf16[32,32], index: 9, kind: input, shape index: {}]
  %s10 = inlined_call_operand.vmem [shape: f32[1,32], index: 10, kind: input, shape index: {}]
  %s11 = inlined_call_operand.vmem [shape: f32[1,32], index: 11, kind: input, shape index: {}]
  %s12 = inlined_call_operand.vmem [shape: f32[1,32], index: 12, kind: input, shape index: {}]
  %s13 = inlined_call_operand.hbm [shape: f32[2,8,32], index: 13, kind: output, shape index: {}]
  %s14 = sld [smem:[#allocation0]]
  $region121: #{tpu_custom_call.1} parent=0
    _
  %s16 = ssub.s32 1, %s14
  %s17 = scalar_select 0, %s16, %s14
  $region1: #{tpu_custom_call.1} parent=0
    #allocation2 [shape = 'u8[8192]{0}', space=vmem, size = 0x2000, scoped, tag = 'input window, operand 0']
    #allocation3 [shape = 's32[2]{0}', space=sflag, size = 0x8, scoped, tag = 'scoped memory for tpu_custom_call.1']
    #allocation4 [shape = 's32[2]{0}', space=sflag, size = 0x8, scoped, tag = 'scoped memory for tpu_custom_call.1']
    #allocation5 [shape = 'u8[8192]{0}', space=vmem, size = 0x2000, scoped, tag = 'input window, operand 1']
    #allocation6 [shape = 's32[2]{0}', space=sflag, size = 0x8, scoped, tag = 'scoped memory for tpu_custom_call.1']
    #allocation7 [shape = 'u8[8192]{0}', space=vmem, size = 0x2000, scoped, tag = 'input window, operand 2']
    #allocation8 [shape = 'u8[8192]{0}', space=vmem, size = 0x2000, scoped, tag = 'input window, operand 3, single buffered']
    #allocation9 [shape = 's32[1]{0}', space=sflag, size = 0x4, scoped, tag = 'scoped memory for tpu_custom_call.1']
    #allocation10 [shape = 'u8[512]{0}', space=vmem, size = 0x400, scoped, tag = 'input window, operand 4, single buffered']
    #allocation11 [shape = 'u8[8192]{0}', space=vmem, size = 0x2000, scoped, tag = 'input window, operand 5, single buffered']
    #allocation12 [shape = 's32[1]{0}', space=sflag, size = 0x4, scoped, tag = 'scoped memory for tpu_custom_call.1']
    #allocation13 [shape = 'u8[512]{0}', space=vmem, size = 0x400, scoped, tag = 'input window, operand 6, single buffered']
    #allocation14 [shape = 'u8[8192]{0}', space=vmem, size = 0x2000, scoped, tag = 'input window, operand 7, single buffered']
    #allocation15 [shape = 's32[1]{0}', space=sflag, size = 0x4, scoped, tag = 'scoped memory for tpu_custom_call.1']
    #allocation16 [shape = 'u8[512]{0}', space=vmem, size = 0x400, scoped, tag = 'input window, operand 8, single buffered']
    #allocation17 [shape = 'u8[8192]{0}', space=vmem, size = 0x2000, scoped, tag = 'output window, operand 0']
    %18 = vsyncpa [#allocation3], 0
    %s19 = scalar_lea.sflag [#allocation3], 1
    %20 = vsyncpa %s19, 0
    %21 = vsyncpa [#allocation6], 0
    %s22 = scalar_lea.sflag [#allocation6], 1
    %23 = vsyncpa %s22, 0
    %24 = vsyncpa [#allocation9], 0
    %25 = vsyncpa [#allocation12], 0
    %26 = vsyncpa [#allocation15], 0
    %27 = vsyncpa [#allocation4], 0
    %s28 = scalar_lea.sflag [#allocation4], 1
    %29 = vsyncpa %s28, 0
    loop: start=0, step=1, limit=4
    $region2: #{tpu_custom_call.1} parent=1 // loop_pre_header
      _
    $region3: #{tpu_custom_call.1} parent=1 // loop_header
      %s31 = sphi 0, %s35
      %p32 = scmp.ge.s32.totalorder %s31, 4
      %s41 = sphi 0, %s43
      %s44 = sphi 0, %s41
      %s45 = sphi 0, %s44
      %s61 = sphi 0, %s45
      %s67 = sphi 0, %s69
      %s70 = sphi 0, %s67
      %s71 = sphi 0, %s70
      %s87 = sphi 0, %s71
      %s93 = sphi 0, %s95
      %s96 = sphi 0, %s93
      %s97 = sphi 0, %s96
      %s113 = sphi 0, %s97
      %s117 = sphi 0, %s117
      %s119 = sphi 0, %s117
      %s120 = sphi 0, %s119
      %s134 = sphi 0, %s120
      %s138 = sphi 0, %s138
      %s140 = sphi 0, %s138
      %s141 = sphi 0, %s140
      %s155 = sphi 0, %s141
      %s159 = sphi 0, %s159
      %s161 = sphi 0, %s159
      %s162 = sphi 0, %s161
      %s176 = sphi 0, %s162
      %s180 = sphi 0, %s180
      %s182 = sphi 0, %s180
      %s183 = sphi 0, %s182
      %s197 = sphi 0, %s183
      %s201 = sphi 0, %s201
      %s203 = sphi 0, %s201
      %s204 = sphi 0, %s203
      %s218 = sphi 0, %s204
      %s222 = sphi 0, %s222
      %s224 = sphi 0, %s222
      %s225 = sphi 0, %s224
      %s239 = sphi 0, %s225
      %s243 = sphi 0, %s243
      %s245 = sphi 0, %s243
      %s246 = sphi 0, %s245
      %s260 = sphi 0, %s246
      %s264 = sphi 0, %s264
      %s266 = sphi 0, %s264
      %s267 = sphi 0, %s266
      %s281 = sphi 0, %s267
      %s285 = sphi 0, %s285
      %s287 = sphi 0, %s285
      %s288 = sphi 0, %s287
      %s302 = sphi 0, %s288
      %s306 = sphi 0, %s306
      %s308 = sphi 0, %s306
      %s309 = sphi 0, %s308
      %s323 = sphi 0, %s309
      %s329 = sphi 0, %s331
      %s332 = sphi 0, %s329
      %s333 = sphi 0, %s332
      %s349 = sphi 0, %s333
    $region4: #{tpu_custom_call.1} parent=1 // loop_header_branch
      %34 = sbr.rel (%p32) target = $region8
    $region5: #{tpu_custom_call.1} parent=1 // loop_body
      %s36 = ssub.s32 %s31, 1
      %s37 = ssub.s32 %s31, 2
      %s38 = sadd.s32 %s31, 1
      %s39 = ssub.s32 %s31, %s38
      %p40 = scmp.eq.s32.totalorder %s39, 0
      %s42 = sadd.s32 %s41, 1
      %s43 = scalar_select %p40, %s41, %s42
      %p46 = pneg %p40
      %p47 = scmp.eq.s32.totalorder %s31, 1
      %p48 = por %p46, %p47
      %p49 = scmp.ne.s32.totalorder %s41, %s44
      %p50 = scmp.eq.s32.totalorder %s31, 0
      %p51 = por %p49, %p50
      %p52 = scmp.ne.s32.totalorder %s41, %s44
      %p53 = scmp.eq.s32.totalorder %s36, 1
      %p54 = por %p52, %p53
      %p55 = scmp.ne.s32.totalorder %s44, %s45
      %p56 = scmp.eq.s32.totalorder %s36, 0
      %p57 = por %p55, %p56
      %p58 = scmp.ne.s32.totalorder %s44, %s45
      %p59 = scmp.eq.s32.totalorder %s37, 1
      %p60 = por %p58, %p59
      %p62 = scmp.ne.s32.totalorder %s45, %s61
      %p63 = scmp.eq.s32.totalorder %s37, 0
      %p64 = por %p62, %p63
      %s65 = ssub.s32 %s31, %s38
      %p66 = scmp.eq.s32.totalorder %s65, 0
      %s68 = sadd.s32 %s67, 1
      %s69 = scalar_select %p66, %s67, %s68
      %p72 = pneg %p66
      %p73 = scmp.eq.s32.totalorder %s31, 1
      %p74 = por %p72, %p73
      %p75 = scmp.ne.s32.totalorder %s67, %s70
      %p76 = scmp.eq.s32.totalorder %s31, 0
      %p77 = por %p75, %p76
      %p78 = scmp.ne.s32.totalorder %s67, %s70
      %p79 = scmp.eq.s32.totalorder %s36, 1
      %p80 = por %p78, %p79
      %p81 = scmp.ne.s32.totalorder %s70, %s71
      %p82 = scmp.eq.s32.totalorder %s36, 0
      %p83 = por %p81, %p82
      %p84 = scmp.ne.s32.totalorder %s70, %s71
      %p85 = scmp.eq.s32.totalorder %s37, 1
      %p86 = por %p84, %p85
      %p88 = scmp.ne.s32.totalorder %s71, %s87
      %p89 = scmp.eq.s32.totalorder %s37, 0
      %p90 = por %p88, %p89
      %s91 = ssub.s32 %s31, %s38
      %p92 = scmp.eq.s32.totalorder %s91, 0
      %s94 = sadd.s32 %s93, 1
      %s95 = scalar_select %p92, %s93, %s94
      %p98 = pneg %p92
      %p99 = scmp.eq.s32.totalorder %s31, 1
      %p100 = por %p98, %p99
      %p101 = scmp.ne.s32.totalorder %s93, %s96
      %p102 = scmp.eq.s32.totalorder %s31, 0
      %p103 = por %p101, %p102
      %p104 = scmp.ne.s32.totalorder %s93, %s96
      %p105 = scmp.eq.s32.totalorder %s36, 1
      %p106 = por %p104, %p105
      %p107 = scmp.ne.s32.totalorder %s96, %s97
      %p108 = scmp.eq.s32.totalorder %s36, 0
      %p109 = por %p107, %p108
      %p110 = scmp.ne.s32.totalorder %s96, %s97
      %p111 = scmp.eq.s32.totalorder %s37, 1
      %p112 = por %p110, %p111
      %p114 = scmp.ne.s32.totalorder %s97, %s113
      %p115 = scmp.eq.s32.totalorder %s37, 0
      %p116 = por %p114, %p115
      %s118 = sadd.s32 %s117, 1
      %p121 = scmp.eq.s32.totalorder %s31, 1
      %p122 = scmp.ne.s32.totalorder %s117, %s119
      %p123 = scmp.eq.s32.totalorder %s31, 0
      %p124 = por %p122, %p123
      %p125 = scmp.ne.s32.totalorder %s117, %s119
      %p126 = scmp.eq.s32.totalorder %s36, 1
      %p127 = por %p125, %p126
      %p128 = scmp.ne.s32.totalorder %s119, %s120
      %p129 = scmp.eq.s32.totalorder %s36, 0
      %p130 = por %p128, %p129
      %p131 = scmp.ne.s32.totalorder %s119, %s120
      %p132 = scmp.eq.s32.totalorder %s37, 1
      %p133 = por %p131, %p132
      %p135 = scmp.ne.s32.totalorder %s120, %s134
      %p136 = scmp.eq.s32.totalorder %s37, 0
      %p137 = por %p135, %p136
      %s139 = sadd.s32 %s138, 1
      %p142 = scmp.eq.s32.totalorder %s31, 1
      %p143 = scmp.ne.s32.totalorder %s138, %s140
      %p144 = scmp.eq.s32.totalorder %s31, 0
      %p145 = por %p143, %p144
      %p146 = scmp.ne.s32.totalorder %s138, %s140
      %p147 = scmp.eq.s32.totalorder %s36, 1
      %p148 = por %p146, %p147
      %p149 = scmp.ne.s32.totalorder %s140, %s141
      %p150 = scmp.eq.s32.totalorder %s36, 0
      %p151 = por %p149, %p150
      %p152 = scmp.ne.s32.totalorder %s140, %s141
      %p153 = scmp.eq.s32.totalorder %s37, 1
      %p154 = por %p152, %p153
      %p156 = scmp.ne.s32.totalorder %s141, %s155
      %p157 = scmp.eq.s32.totalorder %s37, 0
      %p158 = por %p156, %p157
      %s160 = sadd.s32 %s159, 1
      %p163 = scmp.eq.s32.totalorder %s31, 1
      %p164 = scmp.ne.s32.totalorder %s159, %s161
      %p165 = scmp.eq.s32.totalorder %s31, 0
      %p166 = por %p164, %p165
      %p167 = scmp.ne.s32.totalorder %s159, %s161
      %p168 = scmp.eq.s32.totalorder %s36, 1
      %p169 = por %p167, %p168
      %p170 = scmp.ne.s32.totalorder %s161, %s162
      %p171 = scmp.eq.s32.totalorder %s36, 0
      %p172 = por %p170, %p171
      %p173 = scmp.ne.s32.totalorder %s161, %s162
      %p174 = scmp.eq.s32.totalorder %s37, 1
      %p175 = por %p173, %p174
      %p177 = scmp.ne.s32.totalorder %s162, %s176
      %p178 = scmp.eq.s32.totalorder %s37, 0
      %p179 = por %p177, %p178
      %s181 = sadd.s32 %s180, 1
      %p184 = scmp.eq.s32.totalorder %s31, 1
      %p185 = scmp.ne.s32.totalorder %s180, %s182
      %p186 = scmp.eq.s32.totalorder %s31, 0
      %p187 = por %p185, %p186
      %p188 = scmp.ne.s32.totalorder %s180, %s182
      %p189 = scmp.eq.s32.totalorder %s36, 1
      %p190 = por %p188, %p189
      %p191 = scmp.ne.s32.totalorder %s182, %s183
      %p192 = scmp.eq.s32.totalorder %s36, 0
      %p193 = por %p191, %p192
      %p194 = scmp.ne.s32.totalorder %s182, %s183
      %p195 = scmp.eq.s32.totalorder %s37, 1
      %p196 = por %p194, %p195
      %p198 = scmp.ne.s32.totalorder %s183, %s197
      %p199 = scmp.eq.s32.totalorder %s37, 0
      %p200 = por %p198, %p199
      %s202 = sadd.s32 %s201, 1
      %p205 = scmp.eq.s32.totalorder %s31, 1
      %p206 = scmp.ne.s32.totalorder %s201, %s203
      %p207 = scmp.eq.s32.totalorder %s31, 0
      %p208 = por %p206, %p207
      %p209 = scmp.ne.s32.totalorder %s201, %s203
      %p210 = scmp.eq.s32.totalorder %s36, 1
      %p211 = por %p209, %p210
      %p212 = scmp.ne.s32.totalorder %s203, %s204
      %p213 = scmp.eq.s32.totalorder %s36, 0
      %p214 = por %p212, %p213
      %p215 = scmp.ne.s32.totalorder %s203, %s204
      %p216 = scmp.eq.s32.totalorder %s37, 1
      %p217 = por %p215, %p216
      %p219 = scmp.ne.s32.totalorder %s204, %s218
      %p220 = scmp.eq.s32.totalorder %s37, 0
      %p221 = por %p219, %p220
      %s223 = sadd.s32 %s222, 1
      %p226 = scmp.eq.s32.totalorder %s31, 1
      %p227 = scmp.ne.s32.totalorder %s222, %s224
      %p228 = scmp.eq.s32.totalorder %s31, 0
      %p229 = por %p227, %p228
      %p230 = scmp.ne.s32.totalorder %s222, %s224
      %p231 = scmp.eq.s32.totalorder %s36, 1
      %p232 = por %p230, %p231
      %p233 = scmp.ne.s32.totalorder %s224, %s225
      %p234 = scmp.eq.s32.totalorder %s36, 0
      %p235 = por %p233, %p234
      %p236 = scmp.ne.s32.totalorder %s224, %s225
      %p237 = scmp.eq.s32.totalorder %s37, 1
      %p238 = por %p236, %p237
      %p240 = scmp.ne.s32.totalorder %s225, %s239
      %p241 = scmp.eq.s32.totalorder %s37, 0
      %p242 = por %p240, %p241
      %s244 = sadd.s32 %s243, 1
      %p247 = scmp.eq.s32.totalorder %s31, 1
      %p248 = scmp.ne.s32.totalorder %s243, %s245
      %p249 = scmp.eq.s32.totalorder %s31, 0
      %p250 = por %p248, %p249
      %p251 = scmp.ne.s32.totalorder %s243, %s245
      %p252 = scmp.eq.s32.totalorder %s36, 1
      %p253 = por %p251, %p252
      %p254 = scmp.ne.s32.totalorder %s245, %s246
      %p255 = scmp.eq.s32.totalorder %s36, 0
      %p256 = por %p254, %p255
      %p257 = scmp.ne.s32.totalorder %s245, %s246
      %p258 = scmp.eq.s32.totalorder %s37, 1
      %p259 = por %p257, %p258
      %p261 = scmp.ne.s32.totalorder %s246, %s260
      %p262 = scmp.eq.s32.totalorder %s37, 0
      %p263 = por %p261, %p262
      %s265 = sadd.s32 %s264, 1
      %p268 = scmp.eq.s32.totalorder %s31, 1
      %p269 = scmp.ne.s32.totalorder %s264, %s266
      %p270 = scmp.eq.s32.totalorder %s31, 0
      %p271 = por %p269, %p270
      %p272 = scmp.ne.s32.totalorder %s264, %s266
      %p273 = scmp.eq.s32.totalorder %s36, 1
      %p274 = por %p272, %p273
      %p275 = scmp.ne.s32.totalorder %s266, %s267
      %p276 = scmp.eq.s32.totalorder %s36, 0
      %p277 = por %p275, %p276
      %p278 = scmp.ne.s32.totalorder %s266, %s267
      %p279 = scmp.eq.s32.totalorder %s37, 1
      %p280 = por %p278, %p279
      %p282 = scmp.ne.s32.totalorder %s267, %s281
      %p283 = scmp.eq.s32.totalorder %s37, 0
      %p284 = por %p282, %p283
      %s286 = sadd.s32 %s285, 1
      %p289 = scmp.eq.s32.totalorder %s31, 1
      %p290 = scmp.ne.s32.totalorder %s285, %s287
      %p291 = scmp.eq.s32.totalorder %s31, 0
      %p292 = por %p290, %p291
      %p293 = scmp.ne.s32.totalorder %s285, %s287
      %p294 = scmp.eq.s32.totalorder %s36, 1
      %p295 = por %p293, %p294
      %p296 = scmp.ne.s32.totalorder %s287, %s288
      %p297 = scmp.eq.s32.totalorder %s36, 0
      %p298 = por %p296, %p297
      %p299 = scmp.ne.s32.totalorder %s287, %s288
      %p300 = scmp.eq.s32.totalorder %s37, 1
      %p301 = por %p299, %p300
      %p303 = scmp.ne.s32.totalorder %s288, %s302
      %p304 = scmp.eq.s32.totalorder %s37, 0
      %p305 = por %p303, %p304
      %s307 = sadd.s32 %s306, 1
      %p310 = scmp.eq.s32.totalorder %s31, 1
      %p311 = scmp.ne.s32.totalorder %s306, %s308
      %p312 = scmp.eq.s32.totalorder %s31, 0
      %p313 = por %p311, %p312
      %p314 = scmp.ne.s32.totalorder %s306, %s308
      %p315 = scmp.eq.s32.totalorder %s36, 1
      %p316 = por %p314, %p315
      %p317 = scmp.ne.s32.totalorder %s308, %s309
      %p318 = scmp.eq.s32.totalorder %s36, 0
      %p319 = por %p317, %p318
      %p320 = scmp.ne.s32.totalorder %s308, %s309
      %p321 = scmp.eq.s32.totalorder %s37, 1
      %p322 = por %p320, %p321
      %p324 = scmp.ne.s32.totalorder %s309, %s323
      %p325 = scmp.eq.s32.totalorder %s37, 0
      %p326 = por %p324, %p325
      %s327 = ssub.s32 %s31, %s38
      %p328 = scmp.eq.s32.totalorder %s327, 0
      %s330 = sadd.s32 %s329, 1
      %s331 = scalar_select %p328, %s329, %s330
      %p334 = pneg %p328
      %p335 = scmp.eq.s32.totalorder %s31, 1
      %p336 = por %p334, %p335
      %p337 = scmp.ne.s32.totalorder %s329, %s332
      %p338 = scmp.eq.s32.totalorder %s31, 0
      %p339 = por %p337, %p338
      %p340 = scmp.ne.s32.totalorder %s329, %s332
      %p341 = scmp.eq.s32.totalorder %s36, 1
      %p342 = por %p340, %p341
      %p343 = scmp.ne.s32.totalorder %s332, %s333
      %p344 = scmp.eq.s32.totalorder %s36, 0
      %p345 = por %p343, %p344
      %p346 = scmp.ne.s32.totalorder %s332, %s333
      %p347 = scmp.eq.s32.totalorder %s37, 1
      %p348 = por %p346, %p347
      %p350 = scmp.ne.s32.totalorder %s333, %s349
      %p351 = scmp.eq.s32.totalorder %s37, 0
      %p352 = por %p350, %p351
      %p353 = scmp.le.s32.totalorder 1, %s31
      %p354 = scmp.lt.s32.totalorder %s31, 3
      %p355 = pnand %p353, %p354
      %p356 = pneg %p355
      // Predicated region
      $region9: #{tpu_custom_call.1} parent=5 // pred_check
        _
      $region10: #{tpu_custom_call.1} parent=5 // pred_check_branch
        %358 = sbr.rel (%p355) target = $region12
      $region11: #{tpu_custom_call.1} parent=5 // pred_region
        %s359 = ssub.s32 %s31, 1
        // Predicated region
        $region13: #{tpu_custom_call.1} parent=11 // pred_check
          %p360 = pneg %p130
        $region14: #{tpu_custom_call.1} parent=11 // pred_check_branch
          %362 = sbr.rel (%p360) target = $region16
        $region15: #{tpu_custom_call.1} parent=11 // pred_region
          %s364 = ssub.s32 256, 256
          %365 = vsyncadd [#allocation9], %s364
          %s366 = sshll.u32 [#allocation8], 4
          %s367 = int_to_ptr.vmem [resolvable:$true] %s366
          %372 = dma.hbm_to_vmem [thread:$0]  %s3, 256, %s367, [#allocation9], 64, 64, 4
        $region16: #{tpu_custom_call.1} parent=11 // pred_fallthru
          _
        // Predicated region
        $region17: #{tpu_custom_call.1} parent=11 // pred_check
          %p373 = pneg %p151
        $region18: #{tpu_custom_call.1} parent=11 // pred_check_branch
          %375 = sbr.rel (%p373) target = $region20
        $region19: #{tpu_custom_call.1} parent=11 // pred_region
          %s377 = ssub.s32 16, 16
          %378 = vsyncadd [#allocation9], %s377
          %s380 = sshll.u32 [#allocation10], 4
          %s381 = int_to_ptr.vmem [resolvable:$true] %s380
          %383 = dma.hbm_to_vmem [thread:$0]  %s4, 16, %s381, [#allocation9]
        $region20: #{tpu_custom_call.1} parent=11 // pred_fallthru
          _
        // Predicated region
        $region21: #{tpu_custom_call.1} parent=11 // pred_check
          %p384 = pneg %p172
        $region22: #{tpu_custom_call.1} parent=11 // pred_check_branch
          %386 = sbr.rel (%p384) target = $region24
        $region23: #{tpu_custom_call.1} parent=11 // pred_region
          %s388 = ssub.s32 256, 256
          %389 = vsyncadd [#allocation12], %s388
          %s390 = sshll.u32 [#allocation11], 4
          %s391 = int_to_ptr.vmem [resolvable:$true] %s390
          %396 = dma.hbm_to_vmem [thread:$0]  %s5, 256, %s391, [#allocation12], 64, 64, 4
        $region24: #{tpu_custom_call.1} parent=11 // pred_fallthru
          _
        // Predicated region
        $region25: #{tpu_custom_call.1} parent=11 // pred_check
          %p397 = pneg %p193
        $region26: #{tpu_custom_call.1} parent=11 // pred_check_branch
          %399 = sbr.rel (%p397) target = $region28
        $region27: #{tpu_custom_call.1} parent=11 // pred_region
          %s401 = ssub.s32 16, 16
          %402 = vsyncadd [#allocation12], %s401
          %s404 = sshll.u32 [#allocation13], 4
          %s405 = int_to_ptr.vmem [resolvable:$true] %s404
          %407 = dma.hbm_to_vmem [thread:$0]  %s6, 16, %s405, [#allocation12]
        $region28: #{tpu_custom_call.1} parent=11 // pred_fallthru
          _
        // Predicated region
        $region29: #{tpu_custom_call.1} parent=11 // pred_check
          %p408 = pneg %p214
        $region30: #{tpu_custom_call.1} parent=11 // pred_check_branch
          %410 = sbr.rel (%p408) target = $region32
        $region31: #{tpu_custom_call.1} parent=11 // pred_region
          %s412 = ssub.s32 256, 256
          %413 = vsyncadd [#allocation15], %s412
          %s414 = sshll.u32 [#allocation14], 4
          %s415 = int_to_ptr.vmem [resolvable:$true] %s414
          %420 = dma.hbm_to_vmem [thread:$0]  %s7, 256, %s415, [#allocation15], 64, 64, 4
        $region32: #{tpu_custom_call.1} parent=11 // pred_fallthru
          _
        // Predicated region
        $region33: #{tpu_custom_call.1} parent=11 // pred_check
          %p421 = pneg %p235
        $region34: #{tpu_custom_call.1} parent=11 // pred_check_branch
          %423 = sbr.rel (%p421) target = $region36
        $region35: #{tpu_custom_call.1} parent=11 // pred_region
          %s425 = ssub.s32 16, 16
          %426 = vsyncadd [#allocation15], %s425
          %s428 = sshll.u32 [#allocation16], 4
          %s429 = int_to_ptr.vmem [resolvable:$true] %s428
          %431 = dma.hbm_to_vmem [thread:$0]  %s8, 16, %s429, [#allocation15]
        $region36: #{tpu_custom_call.1} parent=11 // pred_fallthru
          _
        // Predicated region
        $region37: #{tpu_custom_call.1} parent=11 // pred_check
          %p432 = pneg %p256
        $region38: #{tpu_custom_call.1} parent=11 // pred_check_branch
          %434 = sbr.rel (%p432) target = $region40
        $region39: #{tpu_custom_call.1} parent=11 // pred_region
          _
        $region40: #{tpu_custom_call.1} parent=11 // pred_fallthru
          _
        // Predicated region
        $region41: #{tpu_custom_call.1} parent=11 // pred_check
          %p435 = pneg %p277
        $region42: #{tpu_custom_call.1} parent=11 // pred_check_branch
          %437 = sbr.rel (%p435) target = $region44
        $region43: #{tpu_custom_call.1} parent=11 // pred_region
          _
        $region44: #{tpu_custom_call.1} parent=11 // pred_fallthru
          _
        // Predicated region
        $region45: #{tpu_custom_call.1} parent=11 // pred_check
          %p438 = pneg %p298
        $region46: #{tpu_custom_call.1} parent=11 // pred_check_branch
          %440 = sbr.rel (%p438) target = $region48
        $region47: #{tpu_custom_call.1} parent=11 // pred_region
          _
        $region48: #{tpu_custom_call.1} parent=11 // pred_fallthru
          _
        // Predicated region
        $region49: #{tpu_custom_call.1} parent=11 // pred_check
          %p441 = pneg %p319
        $region50: #{tpu_custom_call.1} parent=11 // pred_check_branch
          %443 = sbr.rel (%p441) target = $region52
        $region51: #{tpu_custom_call.1} parent=11 // pred_region
          _
        $region52: #{tpu_custom_call.1} parent=11 // pred_fallthru
          _
      $region12: #{tpu_custom_call.1} parent=5 // pred_fallthru
        _
      %p444 = scmp.lt.s32.totalorder %s31, 2
      // Predicated region
      $region53: #{tpu_custom_call.1} parent=5 // pred_check
        %p445 = pneg %p444
      $region54: #{tpu_custom_call.1} parent=5 // pred_check_branch
        %447 = sbr.rel (%p445) target = $region56
      $region55: #{tpu_custom_call.1} parent=5 // pred_region
        // Predicated region
        $region57: #{tpu_custom_call.1} parent=55 // pred_check
          %p448 = pneg %p51
        $region58: #{tpu_custom_call.1} parent=55 // pred_check_branch
          %450 = sbr.rel (%p448) target = $region60
        $region59: #{tpu_custom_call.1} parent=55 // pred_region
          %s451 = sand.u32 %s41, 1
          %s452 = scalar_lea.sflag [#allocation3], %s451
          %s453 = sand.u32 %s41, 1
          %s454 = smul.addr %s453, 8
          %s455 = scalar_lea.vmem [#allocation2], %s454
          %s457 = ssub.s32 128, 128
          %458 = vsyncadd %s452, %s457
          %s459 = smul.addr %s31, 128
          %s460 = scalar_lea.hbm %s0, %s459
          %s462 = sshll.u32 %s455, 4
          %s463 = int_to_ptr.vmem [resolvable:$true] %s462
          %465 = dma.hbm_to_vmem [thread:$0]  %s460, 128, %s463, %s452
        $region60: #{tpu_custom_call.1} parent=55 // pred_fallthru
          _
        // Predicated region
        $region61: #{tpu_custom_call.1} parent=55 // pred_check
          %p466 = pneg %p77
        $region62: #{tpu_custom_call.1} parent=55 // pred_check_branch
          %468 = sbr.rel (%p466) target = $region64
        $region63: #{tpu_custom_call.1} parent=55 // pred_region
          %s469 = sand.u32 %s31, 1
          %s470 = scalar_lea.sflag [#allocation6], %s469
          %s471 = sand.u32 %s67, 1
          %s472 = smul.addr %s471, 8
          %s473 = scalar_lea.vmem [#allocation5], %s472
          %s475 = ssub.s32 128, 128
          %476 = vsyncadd %s470, %s475
          %s477 = smul.addr %s31, 128
          %s478 = scalar_lea.hbm %s1, %s477
          %s480 = sshll.u32 %s473, 4
          %s481 = int_to_ptr.vmem [resolvable:$true] %s480
          %483 = dma.hbm_to_vmem [thread:$0]  %s478, 128, %s481, %s470
        $region64: #{tpu_custom_call.1} parent=55 // pred_fallthru
          _
        // Predicated region
        $region65: #{tpu_custom_call.1} parent=55 // pred_check
          %p484 = pneg %p103
        $region66: #{tpu_custom_call.1} parent=55 // pred_check_branch
          %486 = sbr.rel (%p484) target = $region68
        $region67: #{tpu_custom_call.1} parent=55 // pred_region
          %s487 = sand.u32 %s31, 1
          %s488 = scalar_lea.sflag [#allocation6], %s487
          %s489 = sand.u32 %s93, 1
          %s490 = smul.addr %s489, 8
          %s491 = scalar_lea.vmem [#allocation7], %s490
          %s493 = ssub.s32 128, 128
          %494 = vsyncadd %s488, %s493
          %s495 = smul.addr %s31, 128
          %s496 = scalar_lea.hbm %s2, %s495
          %s498 = sshll.u32 %s491, 4
          %s499 = int_to_ptr.vmem [resolvable:$true] %s498
          %501 = dma.hbm_to_vmem [thread:$0]  %s496, 128, %s499, %s488
        $region68: #{tpu_custom_call.1} parent=55 // pred_fallthru
          _
      $region56: #{tpu_custom_call.1} parent=5 // pred_fallthru
        _
      %p502 = scmp.le.s32.totalorder 1, %s31
      %p503 = scmp.lt.s32.totalorder %s31, 3
      %p504 = pnand %p502, %p503
      %p505 = pneg %p504
      // Predicated region
      $region69: #{tpu_custom_call.1} parent=5 // pred_check
        _
      $region70: #{tpu_custom_call.1} parent=5 // pred_check_branch
        %507 = sbr.rel (%p504) target = $region72
      $region71: #{tpu_custom_call.1} parent=5 // pred_region
        %s508 = ssub.s32 %s31, 1
        %s509 = sand.u32 %s44, 1
        %s510 = scalar_lea.sflag [#allocation3], %s509
        %s511 = sand.u32 %s44, 1
        %s512 = smul.addr %s511, 8
        %s513 = scalar_lea.vmem [#allocation2], %s512
        // Predicated region
        $region73: #{tpu_custom_call.1} parent=71 // pred_check
          %p514 = pneg %p57
        $region74: #{tpu_custom_call.1} parent=71 // pred_check_branch
          %516 = sbr.rel (%p514) target = $region76
        $region75: #{tpu_custom_call.1} parent=71 // pred_region
          %517 = dma.done %s510, 128
        $region76: #{tpu_custom_call.1} parent=71 // pred_fallthru
          _
        %s518 = sand.u32 %s36, 1
        %s519 = scalar_lea.sflag [#allocation6], %s518
        %s520 = sand.u32 %s70, 1
        %s521 = smul.addr %s520, 8
        %s522 = scalar_lea.vmem [#allocation5], %s521
        // Predicated region
        $region77: #{tpu_custom_call.1} parent=71 // pred_check
          %p523 = pneg %p83
        $region78: #{tpu_custom_call.1} parent=71 // pred_check_branch
          %525 = sbr.rel (%p523) target = $region80
        $region79: #{tpu_custom_call.1} parent=71 // pred_region
          %526 = dma.done %s519, 128
        $region80: #{tpu_custom_call.1} parent=71 // pred_fallthru
          _
        %s527 = sand.u32 %s36, 1
        %s528 = scalar_lea.sflag [#allocation6], %s527
        %s529 = sand.u32 %s96, 1
        %s530 = smul.addr %s529, 8
        %s531 = scalar_lea.vmem [#allocation7], %s530
        // Predicated region
        $region81: #{tpu_custom_call.1} parent=71 // pred_check
          %p532 = pneg %p109
        $region82: #{tpu_custom_call.1} parent=71 // pred_check_branch
          %534 = sbr.rel (%p532) target = $region84
        $region83: #{tpu_custom_call.1} parent=71 // pred_region
          %535 = dma.done %s528, 128
        $region84: #{tpu_custom_call.1} parent=71 // pred_fallthru
          _
        // Predicated region
        $region85: #{tpu_custom_call.1} parent=71 // pred_check
          %p536 = pneg %p130
        $region86: #{tpu_custom_call.1} parent=71 // pred_check_branch
          %538 = sbr.rel (%p536) target = $region88
        $region87: #{tpu_custom_call.1} parent=71 // pred_region
          %539 = dma.done [#allocation9], 256
        $region88: #{tpu_custom_call.1} parent=71 // pred_fallthru
          _
        // Predicated region
        $region89: #{tpu_custom_call.1} parent=71 // pred_check
          %p540 = pneg %p151
        $region90: #{tpu_custom_call.1} parent=71 // pred_check_branch
          %542 = sbr.rel (%p540) target = $region92
        $region91: #{tpu_custom_call.1} parent=71 // pred_region
          %543 = dma.done [#allocation9], 16
        $region92: #{tpu_custom_call.1} parent=71 // pred_fallthru
          _
        // Predicated region
        $region93: #{tpu_custom_call.1} parent=71 // pred_check
          %p544 = pneg %p172
        $region94: #{tpu_custom_call.1} parent=71 // pred_check_branch
          %546 = sbr.rel (%p544) target = $region96
        $region95: #{tpu_custom_call.1} parent=71 // pred_region
          %547 = dma.done [#allocation12], 256
        $region96: #{tpu_custom_call.1} parent=71 // pred_fallthru
          _
        // Predicated region
        $region97: #{tpu_custom_call.1} parent=71 // pred_check
          %p548 = pneg %p193
        $region98: #{tpu_custom_call.1} parent=71 // pred_check_branch
          %550 = sbr.rel (%p548) target = $region100
        $region99: #{tpu_custom_call.1} parent=71 // pred_region
          %551 = dma.done [#allocation12], 16
        $region100: #{tpu_custom_call.1} parent=71 // pred_fallthru
          _
        // Predicated region
        $region101: #{tpu_custom_call.1} parent=71 // pred_check
          %p552 = pneg %p214
        $region102: #{tpu_custom_call.1} parent=71 // pred_check_branch
          %554 = sbr.rel (%p552) target = $region104
        $region103: #{tpu_custom_call.1} parent=71 // pred_region
          %555 = dma.done [#allocation15], 256
        $region104: #{tpu_custom_call.1} parent=71 // pred_fallthru
          _
        // Predicated region
        $region105: #{tpu_custom_call.1} parent=71 // pred_check
          %p556 = pneg %p235
        $region106: #{tpu_custom_call.1} parent=71 // pred_check_branch
          %558 = sbr.rel (%p556) target = $region108
        $region107: #{tpu_custom_call.1} parent=71 // pred_region
          %559 = dma.done [#allocation15], 16
        $region108: #{tpu_custom_call.1} parent=71 // pred_fallthru
          _
        %s560 = sand.u32 %s44, 1
        %s561 = scalar_lea.sflag [#allocation3], %s560
        %s562 = sand.u32 %s44, 1
        %s563 = smul.addr %s562, 8
        %s564 = scalar_lea.vmem [#allocation2], %s563
        %p565 = pneg %p57
        %p566 = pneg %p54
        %s567 = sand.u32 %s36, 1
        %s568 = scalar_lea.sflag [#allocation6], %s567
        %s569 = sand.u32 %s70, 1
        %s570 = smul.addr %s569, 8
        %s571 = scalar_lea.vmem [#allocation5], %s570
        %p572 = pneg %p83
        %p573 = pneg %p80
        %s574 = sand.u32 %s36, 1
        %s575 = scalar_lea.sflag [#allocation6], %s574
        %s576 = sand.u32 %s96, 1
        %s577 = smul.addr %s576, 8
        %s578 = scalar_lea.vmem [#allocation7], %s577
        %p579 = pneg %p109
        %p580 = pneg %p106
        %p581 = pneg %p130
        %p582 = pneg %p127
        %p583 = pneg %p151
        %p584 = pneg %p148
        %p585 = pneg %p172
        %p586 = pneg %p169
        %p587 = pneg %p193
        %p588 = pneg %p190
        %p589 = pneg %p214
        %p590 = pneg %p211
        %p591 = pneg %p235
        %p592 = pneg %p232
        %p593 = pneg %p256
        %p594 = pneg %p253
        %p595 = pneg %p277
        %p596 = pneg %p274
        %p597 = pneg %p298
        %p598 = pneg %p295
        %p599 = pneg %p319
        %p600 = pneg %p316
        %p601 = pneg %p345
        %p602 = pneg %p342
        %s603 = sand.u32 %s332, 1
        %s604 = scalar_lea.sflag [#allocation4], %s603
        %s605 = sand.u32 %s332, 1
        %s606 = smul.addr %s605, 8
        %s607 = scalar_lea.vmem [#allocation17], %s606
        %v609 = vld [vmem:[%s513] sm:$0xff]
        %v610 = vld [vmem:[%s522] sm:$0xff]
        %v611 = vld [vmem:[%s531] sm:$0xff]
        %v612 = vpack.c.bf16 %v609, %v609
        %v613 = vpack.c.bf16 %v610, %v610
        %v614 = vld [vmem:[#allocation8] sm:$0xf]
        %v615 = vld [vmem:[#allocation8 + $0x4] sm:$0xf]
        %v616 = vld [vmem:[#allocation8 + $0x8] sm:$0xf]
        %v617 = vld [vmem:[#allocation8 + $0xc] sm:$0xf]
        %v618 = vld [vmem:[#allocation10] sm:$0x1]
        %v620 = vlaneseq
        %v621 = vshrl.u32 %v620, 7
        %v622 = vsub.s32 0, %v621
        %v623 = vrot.slane %v618, %v622
        %v629 = vunpack.c.l.b16 %v614
        %v630 = vunpack.c.l.b16 %v615
        %v631 = vunpack.c.l.b16 %v616
        %v632 = vunpack.c.l.b16 %v617
        %v633 = vpack.c.b16 %v630, %v629
        %v634 = vpack.c.b16 %v632, %v631
        %vm637 = vcmask 261120
        %v639 = vsel %vm637, %v612, 0
        %641 = vmatprep.subr.bf16.mxu0 0
        %642 = vmatpush1.bf16.msra.mxu0 0
        %643 = vmatprep.subr.bf16.mxu0 0
        %644 = vmatpush1.bf16.msra.mxu0 0
        %645 = vmatprep.subr.bf16.mxu0 0
        %646 = vmatpush1.bf16.msra.mxu0 0
        %647 = vmatprep.subr.bf16.mxu0 0
        %648 = vmatpush1.bf16.msra.mxu0 0
        %649 = vmatprep.subr.bf16.mxu0 0
        %650 = vmatpush1.bf16.msra.mxu0 0
        %651 = vmatprep.subr.bf16.mxu0 0
        %652 = vmatpush1.bf16.msra.mxu0 0
        %653 = vmatprep.subr.bf16.mxu0 0
        %654 = vmatpush1.bf16.msra.mxu0 %v634
        %655 = vmatprep.subr.bf16.mxu0 0
        %656 = vmatpush1.bf16.msra.mxu0 %v633
        %657 = vmatprep.subr.bf16.mxu0 0
        %658 = vmatpush2.bf16.msra.mxu0 0
        %659 = vmatprep.subr.bf16.mxu0 0
        %660 = vmatpush2.bf16.msra.mxu0 0
        %661 = vmatprep.subr.bf16.mxu0 0
        %662 = vmatpush2.bf16.msra.mxu0 0
        %663 = vmatprep.subr.bf16.mxu0 0
        %664 = vmatpush2.bf16.msra.mxu0 0
        %665 = vmatprep.subr.bf16.mxu0 0
        %666 = vmatpush2.bf16.msra.mxu0 0
        %667 = vmatprep.subr.bf16.mxu0 0
        %668 = vmatpush2.bf16.msra.mxu0 0
        %669 = vmatprep.subr.bf16.mxu0 0
        %670 = vmatpush2.bf16.msra.mxu0 0
        %671 = vmatprep.subr.bf16.mxu0 0
        %672 = vmatpush2.bf16.msra.mxu0 0
        %673 = vmatprep.mubr.bf16.mxu0 0
        %674 = vmatmul.mubr.bf16.gmra.mxu0 %v639
        %v675 = vpop.f32.mrf.mxu0
        %v676 = vadd.f32 %v623, %v675
        %v677 = vpop.f32.mrf.mxu0
        %v678 = vpop.f32.mrf.mxu0
        %v679 = vpop.f32.mrf.mxu0
        %680 = vdwg.mxu0
        %v681 = vld [vmem:[#allocation11] sm:$0xf]
        %v682 = vld [vmem:[#allocation11 + $0x4] sm:$0xf]
        %v683 = vld [vmem:[#allocation11 + $0x8] sm:$0xf]
        %v684 = vld [vmem:[#allocation11 + $0xc] sm:$0xf]
        %v685 = vld [vmem:[#allocation13] sm:$0x1]
        %v687 = vlaneseq
        %v688 = vshrl.u32 %v687, 7
        %v689 = vsub.s32 0, %v688
        %v690 = vrot.slane %v685, %v689
        %v696 = vunpack.c.l.b16 %v681
        %v697 = vunpack.c.l.b16 %v682
        %v698 = vunpack.c.l.b16 %v683
        %v699 = vunpack.c.l.b16 %v684
        %v700 = vpack.c.b16 %v697, %v696
        %v701 = vpack.c.b16 %v699, %v698
        %v705 = vsel %vm637, %v613, 0
        %707 = vmatprep.subr.bf16.mxu0 0
        %708 = vmatpush1.bf16.msra.mxu0 0
        %709 = vmatprep.subr.bf16.mxu0 0
        %710 = vmatpush1.bf16.msra.mxu0 0
        %711 = vmatprep.subr.bf16.mxu0 0
        %712 = vmatpush1.bf16.msra.mxu0 0
        %713 = vmatprep.subr.bf16.mxu0 0
        %714 = vmatpush1.bf16.msra.mxu0 0
        %715 = vmatprep.subr.bf16.mxu0 0
        %716 = vmatpush1.bf16.msra.mxu0 0
        %717 = vmatprep.subr.bf16.mxu0 0
        %718 = vmatpush1.bf16.msra.mxu0 0
        %719 = vmatprep.subr.bf16.mxu0 0
        %720 = vmatpush1.bf16.msra.mxu0 %v701
        %721 = vmatprep.subr.bf16.mxu0 0
        %722 = vmatpush1.bf16.msra.mxu0 %v700
        %723 = vmatprep.subr.bf16.mxu0 0
        %724 = vmatpush2.bf16.msra.mxu0 0
        %725 = vmatprep.subr.bf16.mxu0 0
        %726 = vmatpush2.bf16.msra.mxu0 0
        %727 = vmatprep.subr.bf16.mxu0 0
        %728 = vmatpush2.bf16.msra.mxu0 0
        %729 = vmatprep.subr.bf16.mxu0 0
        %730 = vmatpush2.bf16.msra.mxu0 0
        %731 = vmatprep.subr.bf16.mxu0 0
        %732 = vmatpush2.bf16.msra.mxu0 0
        %733 = vmatprep.subr.bf16.mxu0 0
        %734 = vmatpush2.bf16.msra.mxu0 0
        %735 = vmatprep.subr.bf16.mxu0 0
        %736 = vmatpush2.bf16.msra.mxu0 0
        %737 = vmatprep.subr.bf16.mxu0 0
        %738 = vmatpush2.bf16.msra.mxu0 0
        %739 = vmatprep.mubr.bf16.mxu0 0
        %740 = vmatmul.mubr.bf16.gmra.mxu0 %v705
        %v741 = vpop.f32.mrf.mxu0
        %v742 = vadd.f32 %v690, %v741
        %v743 = vpop.f32.mrf.mxu0
        %v744 = vpop.f32.mrf.mxu0
        %v745 = vpop.f32.mrf.mxu0
        %746 = vdwg.mxu0
        %v747 = vld [vmem:[#allocation14] sm:$0xf]
        %v748 = vld [vmem:[#allocation14 + $0x4] sm:$0xf]
        %v749 = vld [vmem:[#allocation14 + $0x8] sm:$0xf]
        %v750 = vld [vmem:[#allocation14 + $0xc] sm:$0xf]
        %v751 = vld [vmem:[#allocation16] sm:$0x1]
        %v753 = vlaneseq
        %v754 = vshrl.u32 %v753, 7
        %v755 = vsub.s32 0, %v754
        %v756 = vrot.slane %v751, %v755
        %v762 = vunpack.c.l.b16 %v747
        %v763 = vunpack.c.l.b16 %v748
        %v764 = vunpack.c.l.b16 %v749
        %v765 = vunpack.c.l.b16 %v750
        %v766 = vpack.c.b16 %v763, %v762
        %v767 = vpack.c.b16 %v765, %v764
        %770 = vmatprep.subr.bf16.mxu0 0
        %771 = vmatpush1.bf16.msra.mxu0 0
        %772 = vmatprep.subr.bf16.mxu0 0
        %773 = vmatpush1.bf16.msra.mxu0 0
        %774 = vmatprep.subr.bf16.mxu0 0
        %775 = vmatpush1.bf16.msra.mxu0 0
        %776 = vmatprep.subr.bf16.mxu0 0
        %777 = vmatpush1.bf16.msra.mxu0 0
        %778 = vmatprep.subr.bf16.mxu0 0
        %779 = vmatpush1.bf16.msra.mxu0 0
        %780 = vmatprep.subr.bf16.mxu0 0
        %781 = vmatpush1.bf16.msra.mxu0 0
        %782 = vmatprep.subr.bf16.mxu0 0
        %783 = vmatpush1.bf16.msra.mxu0 %v767
        %784 = vmatprep.subr.bf16.mxu0 0
        %785 = vmatpush1.bf16.msra.mxu0 %v766
        %786 = vmatprep.subr.bf16.mxu0 0
        %787 = vmatpush2.bf16.msra.mxu0 0
        %788 = vmatprep.subr.bf16.mxu0 0
        %789 = vmatpush2.bf16.msra.mxu0 0
        %790 = vmatprep.subr.bf16.mxu0 0
        %791 = vmatpush2.bf16.msra.mxu0 0
        %792 = vmatprep.subr.bf16.mxu0 0
        %793 = vmatpush2.bf16.msra.mxu0 0
        %794 = vmatprep.subr.bf16.mxu0 0
        %795 = vmatpush2.bf16.msra.mxu0 0
        %796 = vmatprep.subr.bf16.mxu0 0
        %797 = vmatpush2.bf16.msra.mxu0 0
        %798 = vmatprep.subr.bf16.mxu0 0
        %799 = vmatpush2.bf16.msra.mxu0 0
        %800 = vmatprep.subr.bf16.mxu0 0
        %801 = vmatpush2.bf16.msra.mxu0 0
        %802 = vmatprep.mubr.bf16.mxu0 0
        %803 = vmatmul.mubr.bf16.gmra.mxu0 %v705
        %v804 = vpop.f32.mrf.mxu0
        %v805 = vadd.f32 %v756, %v804
        %v806 = vpop.f32.mrf.mxu0
        %v807 = vpop.f32.mrf.mxu0
        %v808 = vpop.f32.mrf.mxu0
        %809 = vdwg.mxu0
        %v810 = vpack.c.bf16 %v676, %v676
        %v811 = vpack.c.bf16 %v742, %v742
        %v812 = vpack.c.bf16 %v805, %v805
        %vm813 = vcmask 64512
        %v815 = vsel %vm813, %v810, 0
        %v818 = vsel %vm813, %v811, 0
        %820 = vmatprep.subr.bf16.mxu0 0
        %821 = vmatpush1.bf16.xpose.msra.mxu0 0
        %822 = vmatprep.subr.bf16.mxu0 0
        %823 = vmatpush1.bf16.xpose.msra.mxu0 0
        %824 = vmatprep.subr.bf16.mxu0 0
        %825 = vmatpush1.bf16.xpose.msra.mxu0 0
        %826 = vmatprep.subr.bf16.mxu0 0
        %827 = vmatpush1.bf16.xpose.msra.mxu0 0
        %828 = vmatprep.subr.bf16.mxu0 0
        %829 = vmatpush1.bf16.xpose.msra.mxu0 0
        %830 = vmatprep.subr.bf16.mxu0 0
        %831 = vmatpush1.bf16.xpose.msra.mxu0 0
        %832 = vmatprep.subr.bf16.mxu0 0
        %833 = vmatpush1.bf16.xpose.msra.mxu0 0
        %834 = vmatprep.subr.bf16.mxu0 0
        %835 = vmatpush1.bf16.xpose.msra.mxu0 %v818
        %836 = vmatprep.subr.bf16.mxu0 0
        %837 = vmatpush2.bf16.xpose.msra.mxu0 0
        %838 = vmatprep.subr.bf16.mxu0 0
        %839 = vmatpush2.bf16.xpose.msra.mxu0 0
        %840 = vmatprep.subr.bf16.mxu0 0
        %841 = vmatpush2.bf16.xpose.msra.mxu0 0
        %842 = vmatprep.subr.bf16.mxu0 0
        %843 = vmatpush2.bf16.xpose.msra.mxu0 0
        %844 = vmatprep.subr.bf16.mxu0 0
        %845 = vmatpush2.bf16.xpose.msra.mxu0 0
        %846 = vmatprep.subr.bf16.mxu0 0
        %847 = vmatpush2.bf16.xpose.msra.mxu0 0
        %848 = vmatprep.subr.bf16.mxu0 0
        %849 = vmatpush2.bf16.xpose.msra.mxu0 0
        %850 = vmatprep.subr.bf16.mxu0 0
        %851 = vmatpush2.bf16.xpose.msra.mxu0 0
        %852 = vmatprep.mubr.bf16.mxu0 0
        %853 = vmatmul.mubr.bf16.gmra.mxu0 %v815
        %v854 = vpop.f32.mrf.mxu0
        %v855 = vadd.f32 0.0, %v854
        %v856 = vpop.f32.mrf.mxu0
        %v857 = vpop.f32.mrf.mxu0
        %v858 = vpop.f32.mrf.mxu0
        %859 = vdwg.mxu0
        %v860 = vmul.f32 %v855, 0.35355338
        %v861 = vadd.f32 %v860, %v611
        %v862 = vsel %vm813, %v861, -inf
        %863 = vmax.xlane.f32.xlu0 %v862
        %v864 = vpop.xlane.xlu0 %863
        %v865 = vsub.f32 %v861, %v864
        %v866 = vmul.f32 %v865, 1.442695
        %v867 = vpow.pop %v866
        %v868 = vsel %vm813, %v867, 0.0
        %869 = vadd.xlane.f32.xlu0 %v868
        %v870 = vpop.xlane.xlu0 %869
        %v871 = vrcp.pop %v870
        %v872 = vmul.f32 %v867, %v871
        %v873 = vpack.c.bf16 %v872, %v872
        %v875 = vsel %vm813, %v873, 0
        %vm877 = vcmask 1043456
        %v879 = vsel %vm877, %v812, 0
        %881 = vmatprep.subr.bf16.mxu0 0
        %882 = vmatpush1.bf16.msra.mxu0 0
        %883 = vmatprep.subr.bf16.mxu0 0
        %884 = vmatpush1.bf16.msra.mxu0 0
        %885 = vmatprep.subr.bf16.mxu0 0
        %886 = vmatpush1.bf16.msra.mxu0 0
        %887 = vmatprep.subr.bf16.mxu0 0
        %888 = vmatpush1.bf16.msra.mxu0 0
        %889 = vmatprep.subr.bf16.mxu0 0
        %890 = vmatpush1.bf16.msra.mxu0 0
        %891 = vmatprep.subr.bf16.mxu0 0
        %892 = vmatpush1.bf16.msra.mxu0 0
        %893 = vmatprep.subr.bf16.mxu0 0
        %894 = vmatpush1.bf16.msra.mxu0 0
        %895 = vmatprep.subr.bf16.mxu0 0
        %896 = vmatpush1.bf16.msra.mxu0 %v879
        %897 = vmatprep.subr.bf16.mxu0 0
        %898 = vmatpush2.bf16.msra.mxu0 0
        %899 = vmatprep.subr.bf16.mxu0 0
        %900 = vmatpush2.bf16.msra.mxu0 0
        %901 = vmatprep.subr.bf16.mxu0 0
        %902 = vmatpush2.bf16.msra.mxu0 0
        %903 = vmatprep.subr.bf16.mxu0 0
        %904 = vmatpush2.bf16.msra.mxu0 0
        %905 = vmatprep.subr.bf16.mxu0 0
        %906 = vmatpush2.bf16.msra.mxu0 0
        %907 = vmatprep.subr.bf16.mxu0 0
        %908 = vmatpush2.bf16.msra.mxu0 0
        %909 = vmatprep.subr.bf16.mxu0 0
        %910 = vmatpush2.bf16.msra.mxu0 0
        %911 = vmatprep.subr.bf16.mxu0 0
        %912 = vmatpush2.bf16.msra.mxu0 0
        %913 = vmatprep.mubr.bf16.mxu0 0
        %914 = vmatmul.mubr.bf16.gmra.mxu0 %v875
        %v915 = vpop.f32.mrf.mxu0
        %v916 = vadd.f32 0.0, %v915
        %v917 = vpop.f32.mrf.mxu0
        %v918 = vpop.f32.mrf.mxu0
        %v919 = vpop.f32.mrf.mxu0
        %920 = vdwg.mxu0
        %v921 = vpack.c.bf16 %v916, %v916
        %v922 = vld [vmem:[%s9] sm:$0xf]
        %924 = vrot.lane.b32.xlu0 %v810, 120
        %v925 = vpop.permute.xlu0 %924
        %927 = vrot.lane.b32.xlu0 %v811, 120
        %v928 = vpop.permute.xlu0 %927
        %v930 = vsel %vm813, %v925, 0
        %v933 = vsel %vm813, %v928, 0
        %935 = vmatprep.subr.bf16.mxu0 0
        %936 = vmatpush1.bf16.xpose.msra.mxu0 0
        %937 = vmatprep.subr.bf16.mxu0 0
        %938 = vmatpush1.bf16.xpose.msra.mxu0 0
        %939 = vmatprep.subr.bf16.mxu0 0
        %940 = vmatpush1.bf16.xpose.msra.mxu0 0
        %941 = vmatprep.subr.bf16.mxu0 0
        %942 = vmatpush1.bf16.xpose.msra.mxu0 0
        %943 = vmatprep.subr.bf16.mxu0 0
        %944 = vmatpush1.bf16.xpose.msra.mxu0 0
        %945 = vmatprep.subr.bf16.mxu0 0
        %946 = vmatpush1.bf16.xpose.msra.mxu0 0
        %947 = vmatprep.subr.bf16.mxu0 0
        %948 = vmatpush1.bf16.xpose.msra.mxu0 0
        %949 = vmatprep.subr.bf16.mxu0 0
        %950 = vmatpush1.bf16.xpose.msra.mxu0 %v933
        %951 = vmatprep.subr.bf16.mxu0 0
        %952 = vmatpush2.bf16.xpose.msra.mxu0 0
        %953 = vmatprep.subr.bf16.mxu0 0
        %954 = vmatpush2.bf16.xpose.msra.mxu0 0
        %955 = vmatprep.subr.bf16.mxu0 0
        %956 = vmatpush2.bf16.xpose.msra.mxu0 0
        %957 = vmatprep.subr.bf16.mxu0 0
        %958 = vmatpush2.bf16.xpose.msra.mxu0 0
        %959 = vmatprep.subr.bf16.mxu0 0
        %960 = vmatpush2.bf16.xpose.msra.mxu0 0
        %961 = vmatprep.subr.bf16.mxu0 0
        %962 = vmatpush2.bf16.xpose.msra.mxu0 0
        %963 = vmatprep.subr.bf16.mxu0 0
        %964 = vmatpush2.bf16.xpose.msra.mxu0 0
        %965 = vmatprep.subr.bf16.mxu0 0
        %966 = vmatpush2.bf16.xpose.msra.mxu0 0
        %967 = vmatprep.mubr.bf16.mxu0 0
        %968 = vmatmul.mubr.bf16.gmra.mxu0 %v930
        %v969 = vpop.f32.mrf.mxu0
        %v970 = vadd.f32 0.0, %v969
        %v971 = vpop.f32.mrf.mxu0
        %v972 = vpop.f32.mrf.mxu0
        %v973 = vpop.f32.mrf.mxu0
        %974 = vdwg.mxu0
        %v975 = vmul.f32 %v970, 0.35355338
        %v976 = vadd.f32 %v975, %v611
        %v977 = vsel %vm813, %v976, -inf
        %978 = vmax.xlane.f32.xlu0 %v977
        %v979 = vpop.xlane.xlu0 %978
        %v980 = vsub.f32 %v976, %v979
        %v981 = vmul.f32 %v980, 1.442695
        %v982 = vpow.pop %v981
        %v983 = vsel %vm813, %v982, 0.0
        %984 = vadd.xlane.f32.xlu0 %v983
        %v985 = vpop.xlane.xlu0 %984
        %v986 = vrcp.pop %v985
        %v987 = vmul.f32 %v982, %v986
        %v988 = vpack.c.bf16 %v987, %v987
        %990 = vrot.lane.b32.xlu0 %v812, 120
        %v991 = vpop.permute.xlu0 %990
        %v993 = vsel %vm813, %v988, 0
        %v996 = vsel %vm877, %v991, 0
        %998 = vmatprep.subr.bf16.mxu0 0
        %999 = vmatpush1.bf16.msra.mxu0 0
        %1000 = vmatprep.subr.bf16.mxu0 0
        %1001 = vmatpush1.bf16.msra.mxu0 0
        %1002 = vmatprep.subr.bf16.mxu0 0
        %1003 = vmatpush1.bf16.msra.mxu0 0
        %1004 = vmatprep.subr.bf16.mxu0 0
        %1005 = vmatpush1.bf16.msra.mxu0 0
        %1006 = vmatprep.subr.bf16.mxu0 0
        %1007 = vmatpush1.bf16.msra.mxu0 0
        %1008 = vmatprep.subr.bf16.mxu0 0
        %1009 = vmatpush1.bf16.msra.mxu0 0
        %1010 = vmatprep.subr.bf16.mxu0 0
        %1011 = vmatpush1.bf16.msra.mxu0 0
        %1012 = vmatprep.subr.bf16.mxu0 0
        %1013 = vmatpush1.bf16.msra.mxu0 %v996
        %1014 = vmatprep.subr.bf16.mxu0 0
        %1015 = vmatpush2.bf16.msra.mxu0 0
        %1016 = vmatprep.subr.bf16.mxu0 0
        %1017 = vmatpush2.bf16.msra.mxu0 0
        %1018 = vmatprep.subr.bf16.mxu0 0
        %1019 = vmatpush2.bf16.msra.mxu0 0
        %1020 = vmatprep.subr.bf16.mxu0 0
        %1021 = vmatpush2.bf16.msra.mxu0 0
        %1022 = vmatprep.subr.bf16.mxu0 0
        %1023 = vmatpush2.bf16.msra.mxu0 0
        %1024 = vmatprep.subr.bf16.mxu0 0
        %1025 = vmatpush2.bf16.msra.mxu0 0
        %1026 = vmatprep.subr.bf16.mxu0 0
        %1027 = vmatpush2.bf16.msra.mxu0 0
        %1028 = vmatprep.subr.bf16.mxu0 0
        %1029 = vmatpush2.bf16.msra.mxu0 0
        %1030 = vmatprep.mubr.bf16.mxu0 0
        %1031 = vmatmul.mubr.bf16.gmra.mxu0 %v993
        %v1032 = vpop.f32.mrf.mxu0
        %v1033 = vadd.f32 0.0, %v1032
        %v1034 = vpop.f32.mrf.mxu0
        %v1035 = vpop.f32.mrf.mxu0
        %v1036 = vpop.f32.mrf.mxu0
        %1037 = vdwg.mxu0
        %v1038 = vpack.c.bf16 %v1033, %v1033
        %v1039 = vld [vmem:[%s9 + $0x4] sm:$0xf]
        %v1041 = vsel %vm813, %v1038, 0
        %v1044 = vsel %vm877, %v1039, 0
        %1046 = vmatprep.subr.bf16.mxu0 0
        %1047 = vmatpush1.bf16.msra.mxu0 0
        %1048 = vmatprep.subr.bf16.mxu0 0
        %1049 = vmatpush1.bf16.msra.mxu0 0
        %1050 = vmatprep.subr.bf16.mxu0 0
        %1051 = vmatpush1.bf16.msra.mxu0 0
        %1052 = vmatprep.subr.bf16.mxu0 0
        %1053 = vmatpush1.bf16.msra.mxu0 0
        %1054 = vmatprep.subr.bf16.mxu0 0
        %1055 = vmatpush1.bf16.msra.mxu0 0
        %1056 = vmatprep.subr.bf16.mxu0 0
        %1057 = vmatpush1.bf16.msra.mxu0 0
        %1058 = vmatprep.subr.bf16.mxu0 0
        %1059 = vmatpush1.bf16.msra.mxu0 0
        %1060 = vmatprep.subr.bf16.mxu0 0
        %1061 = vmatpush1.bf16.msra.mxu0 %v1044
        %1062 = vmatprep.subr.bf16.mxu0 0
        %1063 = vmatpush2.bf16.msra.mxu0 0
        %1064 = vmatprep.subr.bf16.mxu0 0
        %1065 = vmatpush2.bf16.msra.mxu0 0
        %1066 = vmatprep.subr.bf16.mxu0 0
        %1067 = vmatpush2.bf16.msra.mxu0 0
        %1068 = vmatprep.subr.bf16.mxu0 0
        %1069 = vmatpush2.bf16.msra.mxu0 0
        %1070 = vmatprep.subr.bf16.mxu0 0
        %1071 = vmatpush2.bf16.msra.mxu0 0
        %1072 = vmatprep.subr.bf16.mxu0 0
        %1073 = vmatpush2.bf16.msra.mxu0 0
        %1074 = vmatprep.subr.bf16.mxu0 0
        %1075 = vmatpush2.bf16.msra.mxu0 0
        %1076 = vmatprep.subr.bf16.mxu0 0
        %1077 = vmatpush2.bf16.msra.mxu0 0
        %1078 = vmatprep.mubr.bf16.mxu0 0
        %1079 = vmatmul.mubr.bf16.gmra.mxu0 %v1041
        %v1080 = vpop.f32.mrf.mxu0
        %v1081 = vadd.f32 0.0, %v1080
        %v1082 = vpop.f32.mrf.mxu0
        %v1083 = vpop.f32.mrf.mxu0
        %v1084 = vpop.f32.mrf.mxu0
        %1085 = vdwg.mxu0
        %v1087 = vsel %vm813, %v921, 0
        %v1090 = vsel %vm877, %v922, 0
        %1092 = vmatprep.subr.bf16.mxu0 0
        %1093 = vmatpush1.bf16.msra.mxu0 0
        %1094 = vmatprep.subr.bf16.mxu0 0
        %1095 = vmatpush1.bf16.msra.mxu0 0
        %1096 = vmatprep.subr.bf16.mxu0 0
        %1097 = vmatpush1.bf16.msra.mxu0 0
        %1098 = vmatprep.subr.bf16.mxu0 0
        %1099 = vmatpush1.bf16.msra.mxu0 0
        %1100 = vmatprep.subr.bf16.mxu0 0
        %1101 = vmatpush1.bf16.msra.mxu0 0
        %1102 = vmatprep.subr.bf16.mxu0 0
        %1103 = vmatpush1.bf16.msra.mxu0 0
        %1104 = vmatprep.subr.bf16.mxu0 0
        %1105 = vmatpush1.bf16.msra.mxu0 0
        %1106 = vmatprep.subr.bf16.mxu0 0
        %1107 = vmatpush1.bf16.msra.mxu0 %v1090
        %1108 = vmatprep.subr.bf16.mxu0 0
        %1109 = vmatpush2.bf16.msra.mxu0 0
        %1110 = vmatprep.subr.bf16.mxu0 0
        %1111 = vmatpush2.bf16.msra.mxu0 0
        %1112 = vmatprep.subr.bf16.mxu0 0
        %1113 = vmatpush2.bf16.msra.mxu0 0
        %1114 = vmatprep.subr.bf16.mxu0 0
        %1115 = vmatpush2.bf16.msra.mxu0 0
        %1116 = vmatprep.subr.bf16.mxu0 0
        %1117 = vmatpush2.bf16.msra.mxu0 0
        %1118 = vmatprep.subr.bf16.mxu0 0
        %1119 = vmatpush2.bf16.msra.mxu0 0
        %1120 = vmatprep.subr.bf16.mxu0 0
        %1121 = vmatpush2.bf16.msra.mxu0 0
        %1122 = vmatprep.subr.bf16.mxu0 0
        %1123 = vmatpush2.bf16.msra.mxu0 0
        %1124 = vmatprep.mubr.bf16.mxu0 0
        %1125 = vmatmul.mubr.bf16.gmra.mxu0 %v1087
        %v1126 = vpop.f32.mrf.mxu0
        %v1127 = vadd.f32 %v1081, %v1126
        %v1128 = vpop.f32.mrf.mxu0
        %v1129 = vpop.f32.mrf.mxu0
        %v1130 = vpop.f32.mrf.mxu0
        %1131 = vdwg.mxu0
        %1132 = vrot.lane.b32.xlu0 %v810, 112
        %v1133 = vpop.permute.xlu0 %1132
        %1134 = vrot.lane.b32.xlu0 %v811, 112
        %v1135 = vpop.permute.xlu0 %1134
        %v1137 = vsel %vm813, %v1133, 0
        %v1140 = vsel %vm813, %v1135, 0
        %1142 = vmatprep.subr.bf16.mxu0 0
        %1143 = vmatpush1.bf16.xpose.msra.mxu0 0
        %1144 = vmatprep.subr.bf16.mxu0 0
        %1145 = vmatpush1.bf16.xpose.msra.mxu0 0
        %1146 = vmatprep.subr.bf16.mxu0 0
        %1147 = vmatpush1.bf16.xpose.msra.mxu0 0
        %1148 = vmatprep.subr.bf16.mxu0 0
        %1149 = vmatpush1.bf16.xpose.msra.mxu0 0
        %1150 = vmatprep.subr.bf16.mxu0 0
        %1151 = vmatpush1.bf16.xpose.msra.mxu0 0
        %1152 = vmatprep.subr.bf16.mxu0 0
        %1153 = vmatpush1.bf16.xpose.msra.mxu0 0
        %1154 = vmatprep.subr.bf16.mxu0 0
        %1155 = vmatpush1.bf16.xpose.msra.mxu0 0
        %1156 = vmatprep.subr.bf16.mxu0 0
        %1157 = vmatpush1.bf16.xpose.msra.mxu0 %v1140
        %1158 = vmatprep.subr.bf16.mxu0 0
        %1159 = vmatpush2.bf16.xpose.msra.mxu0 0
        %1160 = vmatprep.subr.bf16.mxu0 0
        %1161 = vmatpush2.bf16.xpose.msra.mxu0 0
        %1162 = vmatprep.subr.bf16.mxu0 0
        %1163 = vmatpush2.bf16.xpose.msra.mxu0 0
        %1164 = vmatprep.subr.bf16.mxu0 0
        %1165 = vmatpush2.bf16.xpose.msra.mxu0 0
        %1166 = vmatprep.subr.bf16.mxu0 0
        %1167 = vmatpush2.bf16.xpose.msra.mxu0 0
        %1168 = vmatprep.subr.bf16.mxu0 0
        %1169 = vmatpush2.bf16.xpose.msra.mxu0 0
        %1170 = vmatprep.subr.bf16.mxu0 0
        %1171 = vmatpush2.bf16.xpose.msra.mxu0 0
        %1172 = vmatprep.subr.bf16.mxu0 0
        %1173 = vmatpush2.bf16.xpose.msra.mxu0 0
        %1174 = vmatprep.mubr.bf16.mxu0 0
        %1175 = vmatmul.mubr.bf16.gmra.mxu0 %v1137
        %v1176 = vpop.f32.mrf.mxu0
        %v1177 = vadd.f32 0.0, %v1176
        %v1178 = vpop.f32.mrf.mxu0
        %v1179 = vpop.f32.mrf.mxu0
        %v1180 = vpop.f32.mrf.mxu0
        %1181 = vdwg.mxu0
        %v1182 = vmul.f32 %v1177, 0.35355338
        %v1183 = vadd.f32 %v1182, %v611
        %v1184 = vsel %vm813, %v1183, -inf
        %1185 = vmax.xlane.f32.xlu0 %v1184
        %v1186 = vpop.xlane.xlu0 %1185
        %v1187 = vsub.f32 %v1183, %v1186
        %v1188 = vmul.f32 %v1187, 1.442695
        %v1189 = vpow.pop %v1188
        %v1190 = vsel %vm813, %v1189, 0.0
        %1191 = vadd.xlane.f32.xlu0 %v1190
        %v1192 = vpop.xlane.xlu0 %1191
        %v1193 = vrcp.pop %v1192
        %v1194 = vmul.f32 %v1189, %v1193
        %v1195 = vpack.c.bf16 %v1194, %v1194
        %1196 = vrot.lane.b32.xlu0 %v812, 112
        %v1197 = vpop.permute.xlu0 %1196
        %v1199 = vsel %vm813, %v1195, 0
        %v1202 = vsel %vm877, %v1197, 0
        %1204 = vmatprep.subr.bf16.mxu0 0
        %1205 = vmatpush1.bf16.msra.mxu0 0
        %1206 = vmatprep.subr.bf16.mxu0 0
        %1207 = vmatpush1.bf16.msra.mxu0 0
        %1208 = vmatprep.subr.bf16.mxu0 0
        %1209 = vmatpush1.bf16.msra.mxu0 0
        %1210 = vmatprep.subr.bf16.mxu0 0
        %1211 = vmatpush1.bf16.msra.mxu0 0
        %1212 = vmatprep.subr.bf16.mxu0 0
        %1213 = vmatpush1.bf16.msra.mxu0 0
        %1214 = vmatprep.subr.bf16.mxu0 0
        %1215 = vmatpush1.bf16.msra.mxu0 0
        %1216 = vmatprep.subr.bf16.mxu0 0
        %1217 = vmatpush1.bf16.msra.mxu0 0
        %1218 = vmatprep.subr.bf16.mxu0 0
        %1219 = vmatpush1.bf16.msra.mxu0 %v1202
        %1220 = vmatprep.subr.bf16.mxu0 0
        %1221 = vmatpush2.bf16.msra.mxu0 0
        %1222 = vmatprep.subr.bf16.mxu0 0
        %1223 = vmatpush2.bf16.msra.mxu0 0
        %1224 = vmatprep.subr.bf16.mxu0 0
        %1225 = vmatpush2.bf16.msra.mxu0 0
        %1226 = vmatprep.subr.bf16.mxu0 0
        %1227 = vmatpush2.bf16.msra.mxu0 0
        %1228 = vmatprep.subr.bf16.mxu0 0
        %1229 = vmatpush2.bf16.msra.mxu0 0
        %1230 = vmatprep.subr.bf16.mxu0 0
        %1231 = vmatpush2.bf16.msra.mxu0 0
        %1232 = vmatprep.subr.bf16.mxu0 0
        %1233 = vmatpush2.bf16.msra.mxu0 0
        %1234 = vmatprep.subr.bf16.mxu0 0
        %1235 = vmatpush2.bf16.msra.mxu0 0
        %1236 = vmatprep.mubr.bf16.mxu0 0
        %1237 = vmatmul.mubr.bf16.gmra.mxu0 %v1199
        %v1238 = vpop.f32.mrf.mxu0
        %v1239 = vadd.f32 0.0, %v1238
        %v1240 = vpop.f32.mrf.mxu0
        %v1241 = vpop.f32.mrf.mxu0
        %v1242 = vpop.f32.mrf.mxu0
        %1243 = vdwg.mxu0
        %v1244 = vpack.c.bf16 %v1239, %v1239
        %v1245 = vld [vmem:[%s9 + $0x8] sm:$0xf]
        %v1247 = vsel %vm813, %v1244, 0
        %v1250 = vsel %vm877, %v1245, 0
        %1252 = vmatprep.subr.bf16.mxu0 0
        %1253 = vmatpush1.bf16.msra.mxu0 0
        %1254 = vmatprep.subr.bf16.mxu0 0
        %1255 = vmatpush1.bf16.msra.mxu0 0
        %1256 = vmatprep.subr.bf16.mxu0 0
        %1257 = vmatpush1.bf16.msra.mxu0 0
        %1258 = vmatprep.subr.bf16.mxu0 0
        %1259 = vmatpush1.bf16.msra.mxu0 0
        %1260 = vmatprep.subr.bf16.mxu0 0
        %1261 = vmatpush1.bf16.msra.mxu0 0
        %1262 = vmatprep.subr.bf16.mxu0 0
        %1263 = vmatpush1.bf16.msra.mxu0 0
        %1264 = vmatprep.subr.bf16.mxu0 0
        %1265 = vmatpush1.bf16.msra.mxu0 0
        %1266 = vmatprep.subr.bf16.mxu0 0
        %1267 = vmatpush1.bf16.msra.mxu0 %v1250
        %1268 = vmatprep.subr.bf16.mxu0 0
        %1269 = vmatpush2.bf16.msra.mxu0 0
        %1270 = vmatprep.subr.bf16.mxu0 0
        %1271 = vmatpush2.bf16.msra.mxu0 0
        %1272 = vmatprep.subr.bf16.mxu0 0
        %1273 = vmatpush2.bf16.msra.mxu0 0
        %1274 = vmatprep.subr.bf16.mxu0 0
        %1275 = vmatpush2.bf16.msra.mxu0 0
        %1276 = vmatprep.subr.bf16.mxu0 0
        %1277 = vmatpush2.bf16.msra.mxu0 0
        %1278 = vmatprep.subr.bf16.mxu0 0
        %1279 = vmatpush2.bf16.msra.mxu0 0
        %1280 = vmatprep.subr.bf16.mxu0 0
        %1281 = vmatpush2.bf16.msra.mxu0 0
        %1282 = vmatprep.subr.bf16.mxu0 0
        %1283 = vmatpush2.bf16.msra.mxu0 0
        %1284 = vmatprep.mubr.bf16.mxu0 0
        %1285 = vmatmul.mubr.bf16.gmra.mxu0 %v1247
        %v1286 = vpop.f32.mrf.mxu0
        %v1287 = vadd.f32 0.0, %v1286
        %v1288 = vpop.f32.mrf.mxu0
        %v1289 = vpop.f32.mrf.mxu0
        %v1290 = vpop.f32.mrf.mxu0
        %1291 = vdwg.mxu0
        %v1292 = vadd.f32 %v1127, %v1287
        %1293 = vrot.lane.b32.xlu0 %v810, 104
        %v1294 = vpop.permute.xlu0 %1293
        %1295 = vrot.lane.b32.xlu0 %v811, 104
        %v1296 = vpop.permute.xlu0 %1295
        %v1298 = vsel %vm813, %v1294, 0
        %v1301 = vsel %vm813, %v1296, 0
        %1303 = vmatprep.subr.bf16.mxu0 0
        %1304 = vmatpush1.bf16.xpose.msra.mxu0 0
        %1305 = vmatprep.subr.bf16.mxu0 0
        %1306 = vmatpush1.bf16.xpose.msra.mxu0 0
        %1307 = vmatprep.subr.bf16.mxu0 0
        %1308 = vmatpush1.bf16.xpose.msra.mxu0 0
        %1309 = vmatprep.subr.bf16.mxu0 0
        %1310 = vmatpush1.bf16.xpose.msra.mxu0 0
        %1311 = vmatprep.subr.bf16.mxu0 0
        %1312 = vmatpush1.bf16.xpose.msra.mxu0 0
        %1313 = vmatprep.subr.bf16.mxu0 0
        %1314 = vmatpush1.bf16.xpose.msra.mxu0 0
        %1315 = vmatprep.subr.bf16.mxu0 0
        %1316 = vmatpush1.bf16.xpose.msra.mxu0 0
        %1317 = vmatprep.subr.bf16.mxu0 0
        %1318 = vmatpush1.bf16.xpose.msra.mxu0 %v1301
        %1319 = vmatprep.subr.bf16.mxu0 0
        %1320 = vmatpush2.bf16.xpose.msra.mxu0 0
        %1321 = vmatprep.subr.bf16.mxu0 0
        %1322 = vmatpush2.bf16.xpose.msra.mxu0 0
        %1323 = vmatprep.subr.bf16.mxu0 0
        %1324 = vmatpush2.bf16.xpose.msra.mxu0 0
        %1325 = vmatprep.subr.bf16.mxu0 0
        %1326 = vmatpush2.bf16.xpose.msra.mxu0 0
        %1327 = vmatprep.subr.bf16.mxu0 0
        %1328 = vmatpush2.bf16.xpose.msra.mxu0 0
        %1329 = vmatprep.subr.bf16.mxu0 0
        %1330 = vmatpush2.bf16.xpose.msra.mxu0 0
        %1331 = vmatprep.subr.bf16.mxu0 0
        %1332 = vmatpush2.bf16.xpose.msra.mxu0 0
        %1333 = vmatprep.subr.bf16.mxu0 0
        %1334 = vmatpush2.bf16.xpose.msra.mxu0 0
        %1335 = vmatprep.mubr.bf16.mxu0 0
        %1336 = vmatmul.mubr.bf16.gmra.mxu0 %v1298
        %v1337 = vpop.f32.mrf.mxu0
        %v1338 = vadd.f32 0.0, %v1337
        %v1339 = vpop.f32.mrf.mxu0
        %v1340 = vpop.f32.mrf.mxu0
        %v1341 = vpop.f32.mrf.mxu0
        %1342 = vdwg.mxu0
        %v1343 = vmul.f32 %v1338, 0.35355338
        %v1344 = vadd.f32 %v1343, %v611
        %v1345 = vsel %vm813, %v1344, -inf
        %1346 = vmax.xlane.f32.xlu0 %v1345
        %v1347 = vpop.xlane.xlu0 %1346
        %v1348 = vsub.f32 %v1344, %v1347
        %v1349 = vmul.f32 %v1348, 1.442695
        %v1350 = vpow.pop %v1349
        %v1351 = vsel %vm813, %v1350, 0.0
        %1352 = vadd.xlane.f32.xlu0 %v1351
        %v1353 = vpop.xlane.xlu0 %1352
        %v1354 = vrcp.pop %v1353
        %v1355 = vmul.f32 %v1350, %v1354
        %v1356 = vpack.c.bf16 %v1355, %v1355
        %1357 = vrot.lane.b32.xlu0 %v812, 104
        %v1358 = vpop.permute.xlu0 %1357
        %v1360 = vsel %vm813, %v1356, 0
        %v1363 = vsel %vm877, %v1358, 0
        %1365 = vmatprep.subr.bf16.mxu0 0
        %1366 = vmatpush1.bf16.msra.mxu0 0
        %1367 = vmatprep.subr.bf16.mxu0 0
        %1368 = vmatpush1.bf16.msra.mxu0 0
        %1369 = vmatprep.subr.bf16.mxu0 0
        %1370 = vmatpush1.bf16.msra.mxu0 0
        %1371 = vmatprep.subr.bf16.mxu0 0
        %1372 = vmatpush1.bf16.msra.mxu0 0
        %1373 = vmatprep.subr.bf16.mxu0 0
        %1374 = vmatpush1.bf16.msra.mxu0 0
        %1375 = vmatprep.subr.bf16.mxu0 0
        %1376 = vmatpush1.bf16.msra.mxu0 0
        %1377 = vmatprep.subr.bf16.mxu0 0
        %1378 = vmatpush1.bf16.msra.mxu0 0
        %1379 = vmatprep.subr.bf16.mxu0 0
        %1380 = vmatpush1.bf16.msra.mxu0 %v1363
        %1381 = vmatprep.subr.bf16.mxu0 0
        %1382 = vmatpush2.bf16.msra.mxu0 0
        %1383 = vmatprep.subr.bf16.mxu0 0
        %1384 = vmatpush2.bf16.msra.mxu0 0
        %1385 = vmatprep.subr.bf16.mxu0 0
        %1386 = vmatpush2.bf16.msra.mxu0 0
        %1387 = vmatprep.subr.bf16.mxu0 0
        %1388 = vmatpush2.bf16.msra.mxu0 0
        %1389 = vmatprep.subr.bf16.mxu0 0
        %1390 = vmatpush2.bf16.msra.mxu0 0
        %1391 = vmatprep.subr.bf16.mxu0 0
        %1392 = vmatpush2.bf16.msra.mxu0 0
        %1393 = vmatprep.subr.bf16.mxu0 0
        %1394 = vmatpush2.bf16.msra.mxu0 0
        %1395 = vmatprep.subr.bf16.mxu0 0
        %1396 = vmatpush2.bf16.msra.mxu0 0
        %1397 = vmatprep.mubr.bf16.mxu0 0
        %1398 = vmatmul.mubr.bf16.gmra.mxu0 %v1360
        %v1399 = vpop.f32.mrf.mxu0
        %v1400 = vadd.f32 0.0, %v1399
        %v1401 = vpop.f32.mrf.mxu0
        %v1402 = vpop.f32.mrf.mxu0
        %v1403 = vpop.f32.mrf.mxu0
        %1404 = vdwg.mxu0
        %v1405 = vpack.c.bf16 %v1400, %v1400
        %v1406 = vld [vmem:[%s9 + $0xc] sm:$0xf]
        %v1408 = vsel %vm813, %v1405, 0
        %v1411 = vsel %vm877, %v1406, 0
        %1413 = vmatprep.subr.bf16.mxu0 0
        %1414 = vmatpush1.bf16.msra.mxu0 0
        %1415 = vmatprep.subr.bf16.mxu0 0
        %1416 = vmatpush1.bf16.msra.mxu0 0
        %1417 = vmatprep.subr.bf16.mxu0 0
        %1418 = vmatpush1.bf16.msra.mxu0 0
        %1419 = vmatprep.subr.bf16.mxu0 0
        %1420 = vmatpush1.bf16.msra.mxu0 0
        %1421 = vmatprep.subr.bf16.mxu0 0
        %1422 = vmatpush1.bf16.msra.mxu0 0
        %1423 = vmatprep.subr.bf16.mxu0 0
        %1424 = vmatpush1.bf16.msra.mxu0 0
        %1425 = vmatprep.subr.bf16.mxu0 0
        %1426 = vmatpush1.bf16.msra.mxu0 0
        %1427 = vmatprep.subr.bf16.mxu0 0
        %1428 = vmatpush1.bf16.msra.mxu0 %v1411
        %1429 = vmatprep.subr.bf16.mxu0 0
        %1430 = vmatpush2.bf16.msra.mxu0 0
        %1431 = vmatprep.subr.bf16.mxu0 0
        %1432 = vmatpush2.bf16.msra.mxu0 0
        %1433 = vmatprep.subr.bf16.mxu0 0
        %1434 = vmatpush2.bf16.msra.mxu0 0
        %1435 = vmatprep.subr.bf16.mxu0 0
        %1436 = vmatpush2.bf16.msra.mxu0 0
        %1437 = vmatprep.subr.bf16.mxu0 0
        %1438 = vmatpush2.bf16.msra.mxu0 0
        %1439 = vmatprep.subr.bf16.mxu0 0
        %1440 = vmatpush2.bf16.msra.mxu0 0
        %1441 = vmatprep.subr.bf16.mxu0 0
        %1442 = vmatpush2.bf16.msra.mxu0 0
        %1443 = vmatprep.subr.bf16.mxu0 0
        %1444 = vmatpush2.bf16.msra.mxu0 0
        %1445 = vmatprep.mubr.bf16.mxu0 0
        %1446 = vmatmul.mubr.bf16.gmra.mxu0 %v1408
        %v1447 = vpop.f32.mrf.mxu0
        %v1448 = vadd.f32 0.0, %v1447
        %v1449 = vpop.f32.mrf.mxu0
        %v1450 = vpop.f32.mrf.mxu0
        %v1451 = vpop.f32.mrf.mxu0
        %1452 = vdwg.mxu0
        %v1453 = vadd.f32 %v1292, %v1448
        %v1454 = vld [vmem:[%s10] sm:$0x1]
        %v1456 = vlaneseq
        %v1457 = vshrl.u32 %v1456, 7
        %v1458 = vsub.s32 0, %v1457
        %v1459 = vrot.slane %v1454, %v1458
        %v1461 = vadd.f32 %v1453, %v1459
        %v1462 = vadd.f32 %v609, %v1461
        %v1463 = vsel %vm637, %v1462, 0.0
        %1464 = vadd.xlane.f32.xlu0 %v1463
        %v1465 = vpop.xlane.xlu0 %1464
        %v1466 = vrcp.pop 32.0
        %v1467 = vmul.f32 %v1465, %v1466
        %v1468 = vsub.f32 %v1462, %v1467
        %v1469 = vmul.f32 %v1468, %v1468
        %v1470 = vsel %vm637, %v1469, 0.0
        %1471 = vadd.xlane.f32.xlu0 %v1470
        %v1472 = vpop.xlane.xlu0 %1471
        %v1473 = vmul.f32 %v1472, %v1466
        %v1474 = vadd.f32 %v1473, 1e-05
        %v1475 = vrsqrt.pop %v1474
        %v1476 = vmul.f32 %v1468, %v1475
        %v1477 = vld [vmem:[%s11] sm:$0x1]
        %v1479 = vlaneseq
        %v1480 = vshrl.u32 %v1479, 7
        %v1481 = vsub.s32 0, %v1480
        %v1482 = vrot.slane %v1477, %v1481
        %v1484 = vmul.f32 %v1476, %v1482
        %v1485 = vld [vmem:[%s12] sm:$0x1]
        %v1487 = vlaneseq
        %v1488 = vshrl.u32 %v1487, 7
        %v1489 = vsub.s32 0, %v1488
        %v1490 = vrot.slane %v1485, %v1489
        %v1492 = vadd.f32 %v1484, %v1490
        %1493 = vst.msk [vmem:[%s607] sm:$0xff] %vm637, %v1492
        %s1494 = sand.u32 %s332, 1
        %s1495 = scalar_lea.sflag [#allocation4], %s1494
        %s1496 = sand.u32 %s332, 1
        %s1497 = smul.addr %s1496, 8
        %s1498 = scalar_lea.vmem [#allocation17], %s1497
        // Predicated region
        $region109: #{tpu_custom_call.1} parent=71 // pred_check
          %p1499 = pneg %p342
        $region110: #{tpu_custom_call.1} parent=71 // pred_check_branch
          %1501 = sbr.rel (%p1499) target = $region112
        $region111: #{tpu_custom_call.1} parent=71 // pred_region
          %s1503 = ssub.s32 128, 128
          %1504 = vsyncadd %s1495, %s1503
          %s1505 = smul.addr %s36, 128
          %s1506 = scalar_lea.hbm %s13, %s1505
          %s1508 = sshll.u32 %s1498, 4
          %s1509 = int_to_ptr.vmem [resolvable:$true] %s1508
          %1511 = dma.vmem_to_hbm [thread:$0]  %s1509, 128, %s1506, %s1495
        $region112: #{tpu_custom_call.1} parent=71 // pred_fallthru
          _
      $region72: #{tpu_custom_call.1} parent=5 // pred_fallthru
        _
      %p1512 = scmp.le.s32.totalorder 2, %s31
      // Predicated region
      $region113: #{tpu_custom_call.1} parent=5 // pred_check
        %p1513 = pneg %p1512
      $region114: #{tpu_custom_call.1} parent=5 // pred_check_branch
        %1515 = sbr.rel (%p1513) target = $region116
      $region115: #{tpu_custom_call.1} parent=5 // pred_region
        %s1516 = ssub.s32 %s31, 2
        // Predicated region
        $region117: #{tpu_custom_call.1} parent=115 // pred_check
          %p1517 = pneg %p348
        $region118: #{tpu_custom_call.1} parent=115 // pred_check_branch
          %1519 = sbr.rel (%p1517) target = $region120
        $region119: #{tpu_custom_call.1} parent=115 // pred_region
          %s1520 = sand.u32 %s333, 1
          %s1521 = scalar_lea.sflag [#allocation4], %s1520
          %s1522 = sand.u32 %s333, 1
          %s1523 = smul.addr %s1522, 8
          %s1524 = scalar_lea.vmem [#allocation17], %s1523
          %1525 = dma.done %s1521, 128
        $region120: #{tpu_custom_call.1} parent=115 // pred_fallthru
          _
      $region116: #{tpu_custom_call.1} parent=5 // pred_fallthru
        _
    $region6: #{tpu_custom_call.1} parent=1 // loop_footer
      %s35 = sadd.s32 1, %s31
    $region7: #{tpu_custom_call.1} parent=1 // loop_footer_branch
      %30 = sbr.rel target = $region3
    $region8: #{tpu_custom_call.1} parent=1 // loop_exit
      _
    %1526 = vsyncpa [#allocation3], 1
    %s1527 = scalar_lea.sflag [#allocation3], 1
    %1528 = vsyncpa %s1527, 1
    %1529 = vsyncpa [#allocation6], 1
    %s1530 = scalar_lea.sflag [#allocation6], 1
    %1531 = vsyncpa %s1530, 1
    %1532 = vsyncpa [#allocation9], 1
    %1533 = vsyncpa [#allocation12], 1
    %1534 = vsyncpa [#allocation15], 1
    %1535 = vsyncpa [#allocation4], 1
    %s1536 = scalar_lea.sflag [#allocation4], 1
    %1537 = vsyncpa %s1536, 1

</llo_original>
